<compile_context>
chip_gen: v7x
topology: tpu7x:2x2x1
jax: 0.10.0
libtpu: 0.0.40
codegen_flags: <defaults>
</compile_context>

<pallas_src>
import math
import jax
import jax.numpy as jnp
from jax import lax
from jax.experimental import pallas as pl
from jax.experimental.pallas import tpu as pltpu  # noqa: F401 (imported for completeness)

# ----------------------------- config ---------------------------------------
VOCAB      = 64
VPAD       = 128            # lm_head / slab lane width (lane-dense)
N_EMBD     = 32
N_HEAD     = 2
N_LAYERS   = 2
BLOCK_SIZE = 16
BATCH      = 2
SEQ        = 8
HEAD_DIM   = N_EMBD // N_HEAD
MLP_HIDDEN = 4 * N_EMBD     # 128 (== VPAD, so bfc needs no padding)
EPS        = 1e-5

# bf16 weight-slab row offsets (all weights padded to 128 lanes)
W_PER_LAYER = 3 * N_EMBD + MLP_HIDDEN        # 32(Wqkv)+32(Wproj)+32(Wfc)+128(Wfc2)=224
W_QKV, W_PROJ, W_FC, W_FC2 = 0, N_EMBD, 2 * N_EMBD, 3 * N_EMBD
W_LM = N_LAYERS * W_PER_LAYER                # 448; total rows = 480

# f32 const-slab row offsets (each row = 128 lanes)
C_PER_LAYER = 8          # ln1g, ln1b, bqkv, bproj, ln2g, ln2b, bfc, bfc2
C_FINAL_LN  = N_LAYERS * C_PER_LAYER         # 16
C_MASK      = C_FINAL_LN + 2                 # 18 .. 18+BT-1


def _layernorm(x, g, b):
    """x: (rows, D) f32, g/b: (1, D) f32."""
    mu = jnp.mean(x, axis=-1, keepdims=True)
    var = jnp.mean(jnp.square(x - mu), axis=-1, keepdims=True)
    return (x - mu) * lax.rsqrt(var + EPS) * g + b


# --------------------- single fused forward-pass kernel ---------------------
def fused_transformer_kernel(x_ref, w_ref, c_ref, o_ref):
    BT, D = x_ref.shape
    bf16 = jnp.bfloat16
    x = x_ref[...]                                    # (BT, D) f32
    c = c_ref[...]                                    # (C rows, 128) f32
    mask_bias = c[C_MASK:C_MASK + BT, :BT]            # (BT, BT) additive causal mask

    for l in range(N_LAYERS):
        wb = l * W_PER_LAYER
        cb = l * C_PER_LAYER

        # ---------------- attention (pre-LN, causal MHA) ----------------
        h = _layernorm(x, c[cb:cb + 1, :D], c[cb + 1:cb + 2, :D])
        # fused q|k|v projection: one (BT,D)@(D,128) matmul + one bias add.
        # softmax scale is already folded into the q columns of the weight/bias.
        qkv = (jnp.dot(h.astype(bf16), w_ref[wb + W_QKV: wb + W_QKV + D, :],
                       preferred_element_type=jnp.float32)
               + c[cb + 2:cb + 3, :])                 # (BT, 128); cols 0..95 = q|k|v

        o_heads = []
        for hh in range(N_HEAD):
            q = qkv[:, hh * HEAD_DIM:(hh + 1) * HEAD_DIM]                  # (BT, Dh)
            k = qkv[:, D + hh * HEAD_DIM:D + (hh + 1) * HEAD_DIM]          # (BT, Dh)
            v = qkv[:, 2 * D + hh * HEAD_DIM:2 * D + (hh + 1) * HEAD_DIM]  # (BT, Dh)
            # q @ k^T without materializing a transpose: contract last dims.
            s = lax.dot_general(q.astype(bf16), k.astype(bf16),
                                (((1,), (1,)), ((), ())),
                                preferred_element_type=jnp.float32)        # (BT, BT)
            s = s + mask_bias
            s = s - jnp.max(s, axis=-1, keepdims=True)
            p = jnp.exp(s)
            p = p * pl.reciprocal(jnp.sum(p, axis=-1, keepdims=True), approx=True)
            o_heads.append(jnp.dot(p.astype(bf16), v.astype(bf16),
                                   preferred_element_type=jnp.float32))    # (BT, Dh)
        o = jnp.concatenate(o_heads, axis=-1)          # (BT, D) heads side-by-side
        proj = jnp.dot(o.astype(bf16), w_ref[wb + W_PROJ: wb + W_PROJ + D, :],
                       preferred_element_type=jnp.float32)                 # (BT, 128)
        x = x + proj[:, :D] + c[cb + 3:cb + 4, :D]

        # ---------------- MLP (pre-LN, GELU) ----------------
        h2 = _layernorm(x, c[cb + 4:cb + 5, :D], c[cb + 5:cb + 6, :D])
        fc = (jnp.dot(h2.astype(bf16), w_ref[wb + W_FC: wb + W_FC + D, :],
                      preferred_element_type=jnp.float32)
              + c[cb + 6:cb + 7, :])                   # (BT, 128)
        fc = jax.nn.gelu(fc, approximate=True)         # tanh approx (EUP)
        mlp = jnp.dot(fc.astype(bf16),
                      w_ref[wb + W_FC2: wb + W_FC2 + MLP_HIDDEN, :],
                      preferred_element_type=jnp.float32)                  # (BT, 128)
        x = x + mlp[:, :D] + c[cb + 7:cb + 8, :D]

    # ------------- final LayerNorm + lm_head over all rows -------------
    xf = _layernorm(x, c[C_FINAL_LN:C_FINAL_LN + 1, :D],
                    c[C_FINAL_LN + 1:C_FINAL_LN + 2, :D])
    o_ref[...] = jnp.dot(xf.astype(bf16), w_ref[W_LM: W_LM + D, :],
                         preferred_element_type=jnp.float32)               # (BT, 128)


# ------------------------------ wrapper --------------------------------------
def run_fused(x_flat, packed):
    """x_flat: (B*T, D) f32 -> (B*T, VPAD) f32 logits (lane-dense, padded vocab)."""
    BT = x_flat.shape[0]
    return pl.pallas_call(
        fused_transformer_kernel,
        out_shape=jax.ShapeDtypeStruct((BT, VPAD), jnp.float32),
    )(x_flat, packed["w"], packed["c"])


def transformer_forward(idx, embed, packed):
    """Forward pass with targets=None: returns logits of shape (B, 1, VOCAB)."""
    B, T = idx.shape
    # token embedding (gather is glue); pos_encoding(x) == 0 in the source
    x = jnp.take(embed, idx, axis=0).reshape(B * T, N_EMBD)   # pre-flattened
    logits_pad = run_fused(x, packed)                          # (B*T, VPAD)
    logits = logits_pad.reshape(B, T, VPAD)[:, -1:, :VOCAB]    # like x[:, [-1], :]
    loss, accs = None, None
    return logits, loss, accs


# ------------------------------ parameters -----------------------------------
def init_params(key):
    """PyTorch-layout parameters (Linear weights pre-transposed to (in, out))."""
    def normal(k, shape, std=0.02):
        return (std * jax.random.normal(k, shape)).astype(jnp.float32)

    keys = jax.random.split(key, 4 + 6 * N_LAYERS)
    ki = iter(keys)

    params = {
        "embed": normal(next(ki), (VOCAB, N_EMBD)),                 # nn.Embedding
        "lm_head": normal(next(ki), (N_EMBD, VOCAB)),               # pre-transposed
        "final_ln_g": jnp.ones((1, N_EMBD), jnp.float32),
        "final_ln_b": jnp.zeros((1, N_EMBD), jnp.float32),
        "layers": [],
    }
    proj_std = 0.02 / math.sqrt(2 * N_LAYERS)   # mlp.projection special init
    for _ in range(N_LAYERS):
        layer = [
            jnp.ones((1, N_EMBD), jnp.float32),                     # ln1 gamma
            jnp.zeros((1, N_EMBD), jnp.float32),                    # ln1 beta
            normal(next(ki), (N_EMBD, 3 * N_EMBD)),                 # Wqkv
            jnp.zeros((1, 3 * N_EMBD), jnp.float32),                # bqkv
            normal(next(ki), (N_EMBD, N_EMBD)),                     # Wproj (attn out)
            jnp.zeros((1, N_EMBD), jnp.float32),                    # bproj
            jnp.ones((1, N_EMBD), jnp.float32),                     # ln2 gamma
            jnp.zeros((1, N_EMBD), jnp.float32),                    # ln2 beta
            normal(next(ki), (N_EMBD, MLP_HIDDEN)),                 # Wfc
            jnp.zeros((1, MLP_HIDDEN), jnp.float32),                # bfc
            normal(next(ki), (MLP_HIDDEN, N_EMBD), std=proj_std),   # Wfc2 (mlp.projection)
            jnp.zeros((1, N_EMBD), jnp.float32),                    # bfc2
        ]
        params["layers"].append(layer)
    return params


def _pad_cols(a, n=VPAD):
    return jnp.pad(a, ((0, 0), (0, n - a.shape[1])))


def pack_params(params):
    """Pack everything into two kernel slabs.

    "w": bf16 (480, 128) — row-stacked [Wqkv | Wproj | Wfc | Wfc2] per layer + lm_head,
         every weight zero-padded to 128 output lanes; softmax scale folded into Wq.
    "c": f32 (34, 128)  — LN gammas/betas + all biases (lane-padded) + additive mask.
    """
    D = N_EMBD
    scale = 1.0 / math.sqrt(HEAD_DIM)

    w_rows, c_rows = [], []
    for lp in params["layers"]:
        (ln1g, ln1b, wqkv, bqkv, wproj, bproj,
         ln2g, ln2b, wfc, bfc, wfc2, bfc2) = lp
        wqkv_s = wqkv.at[:, :D].multiply(scale)     # fold 1/sqrt(Dh) into q weights
        bqkv_s = bqkv.at[:, :D].multiply(scale)     # ... and q bias
        w_rows += [_pad_cols(wqkv_s), _pad_cols(wproj), _pad_cols(wfc), _pad_cols(wfc2)]
        c_rows += [_pad_cols(ln1g), _pad_cols(ln1b), _pad_cols(bqkv_s), _pad_cols(bproj),
                   _pad_cols(ln2g), _pad_cols(ln2b), _pad_cols(bfc), _pad_cols(bfc2)]
    w_rows.append(_pad_cols(params["lm_head"]))     # padded VOCAB 64 -> 128 lanes
    c_rows += [_pad_cols(params["final_ln_g"]), _pad_cols(params["final_ln_b"])]

    # additive block-diagonal causal mask over flattened rows (BT, BT)
    BT = BATCH * SEQ
    row = jnp.arange(BT)[:, None]
    col = jnp.arange(BT)[None, :]
    allowed = ((row // SEQ) == (col // SEQ)) & (row >= col)
    mask_bias = jnp.where(allowed, 0.0, -1e30).astype(jnp.float32)
    c_rows.append(_pad_cols(mask_bias))

    return {
        "w": jnp.concatenate(w_rows, axis=0).astype(jnp.bfloat16),   # (480, 128)
        "c": jnp.concatenate(c_rows, axis=0).astype(jnp.float32),    # (34, 128)
    }


# -------------------------- pure-JAX reference --------------------------------
def _ln_ref(x, g, b):
    mu = jnp.mean(x, axis=-1, keepdims=True)
    var = jnp.mean(jnp.square(x - mu), axis=-1, keepdims=True)
    return (x - mu) * lax.rsqrt(var + EPS) * g + b


def reference_forward(idx, params):
    x = jnp.take(params["embed"], idx, axis=0)               # (B, T, D)
    B, T, D = x.shape
    scale = 1.0 / math.sqrt(HEAD_DIM)
    causal = jnp.tril(jnp.ones((T, T), bool))
    for lp in params["layers"]:
        (ln1g, ln1b, wqkv, bqkv, wproj, bproj,
         ln2g, ln2b, wfc, bfc, wfc2, bfc2) = lp
        h = _ln_ref(x, ln1g, ln1b)
        qkv = h @ wqkv + bqkv
        q, k, v = jnp.split(qkv, 3, axis=-1)
        def heads(a):
            return a.reshape(B, T, N_HEAD, HEAD_DIM).transpose(0, 2, 1, 3)
        q, k, v = heads(q), heads(k), heads(v)
        s = jnp.einsum("bhqd,bhkd->bhqk", q, k) * scale
        s = jnp.where(causal, s, -jnp.inf)
        p = jax.nn.softmax(s, axis=-1)
        o = jnp.einsum("bhqk,bhkd->bhqd", p, v).transpose(0, 2, 1, 3).reshape(B, T, D)
        x = x + o @ wproj + bproj
        h2 = _ln_ref(x, ln2g, ln2b)
        x = x + jax.nn.gelu(h2 @ wfc + bfc, approximate=True) @ wfc2 + bfc2
    x = _ln_ref(x, params["final_ln_g"], params["final_ln_b"])
    return (x @ params["lm_head"])[:, -1:, :]


# --------------------------------- main --------------------------------------
if __name__ == "__main__":
    key = jax.random.PRNGKey(0)
    pkey, dkey = jax.random.split(key)
    params = init_params(pkey)
    packed = pack_params(params)

    idx = jax.random.randint(dkey, (BATCH, SEQ), 0, VOCAB, dtype=jnp.int32)

    forward = jax.jit(transformer_forward)
    logits, loss, accs = forward(idx, params["embed"], packed)
    logits = jax.block_until_ready(logits)

    assert logits.shape == (BATCH, 1, VOCAB), logits.shape
    assert logits.dtype == jnp.float32
    assert bool(jnp.all(jnp.isfinite(logits)))

    # loose-tolerance check vs. f32 pure-JAX reference (bf16 weights + approx recip)
    ref = reference_forward(idx, params)
    err = float(jnp.max(jnp.abs(logits - ref)))
    assert err < 5e-2, f"max abs err vs reference = {err}"

    print("KERNEL_OK")
</pallas_src>

<mosaic_0001>
module attributes {stable_mosaic.version = 11 : i64} {
  func.func @fused_transformer_kernel(%arg0: memref<16x32xf32, #tpu.memory_space<vmem>>, %arg1: memref<480x128xbf16, #tpu.memory_space<vmem>>, %arg2: memref<34x128xf32, #tpu.memory_space<vmem>>, %arg3: memref<16x128xf32, #tpu.memory_space<vmem>>) attributes {dimension_semantics = [], scalar_prefetch = 0 : i64, scratch_operands = 0 : i64, tpu.core_type = #tpu.core_type<tc>} {
    %c0 = arith.constant 0 : index
    %c0_0 = arith.constant 0 : index
    %0 = vector.load %arg0[%c0, %c0_0] : memref<16x32xf32, #tpu.memory_space<vmem>>, vector<16x32xf32>
    %c0_1 = arith.constant 0 : index
    %c0_2 = arith.constant 0 : index
    %1 = vector.load %arg2[%c0_1, %c0_2] : memref<34x128xf32, #tpu.memory_space<vmem>>, vector<34x128xf32>
    %2 = vector.extract_strided_slice %1 {offsets = [18, 0], sizes = [16, 16], strides = [1, 1]} : vector<34x128xf32> to vector<16x16xf32>
    %3 = vector.extract_strided_slice %1 {offsets = [0, 0], sizes = [1, 32], strides = [1, 1]} : vector<34x128xf32> to vector<1x32xf32>
    %4 = vector.extract_strided_slice %1 {offsets = [1, 0], sizes = [1, 32], strides = [1, 1]} : vector<34x128xf32> to vector<1x32xf32>
    %cst = arith.constant dense<0.000000e+00> : vector<16xf32>
    %5 = vector.multi_reduction <add>, %0, %cst [1] : vector<16x32xf32> to vector<16xf32>
    %6 = vector.shape_cast %5 : vector<16xf32> to vector<16x1xf32>
    %cst_3 = arith.constant 3.200000e+01 : f32
    %7 = vector.broadcast %cst_3 : f32 to vector<16x1xf32>
    %8 = arith.divf %6, %7 : vector<16x1xf32>
    %9 = vector.broadcast %8 : vector<16x1xf32> to vector<16x32xf32>
    %10 = arith.subf %0, %9 : vector<16x32xf32>
    %11 = arith.mulf %10, %10 : vector<16x32xf32>
    %cst_4 = arith.constant dense<0.000000e+00> : vector<16xf32>
    %12 = vector.multi_reduction <add>, %11, %cst_4 [1] : vector<16x32xf32> to vector<16xf32>
    %13 = vector.shape_cast %12 : vector<16xf32> to vector<16x1xf32>
    %cst_5 = arith.constant 3.200000e+01 : f32
    %14 = vector.broadcast %cst_5 : f32 to vector<16x1xf32>
    %15 = arith.divf %13, %14 : vector<16x1xf32>
    %16 = vector.broadcast %8 : vector<16x1xf32> to vector<16x32xf32>
    %17 = arith.subf %0, %16 : vector<16x32xf32>
    %cst_6 = arith.constant 9.99999974E-6 : f32
    %18 = vector.broadcast %cst_6 : f32 to vector<16x1xf32>
    %19 = arith.addf %15, %18 : vector<16x1xf32>
    %20 = math.rsqrt %19 : vector<16x1xf32>
    %21 = vector.broadcast %20 : vector<16x1xf32> to vector<16x32xf32>
    %22 = arith.mulf %17, %21 : vector<16x32xf32>
    %23 = vector.broadcast %3 : vector<1x32xf32> to vector<16x32xf32>
    %24 = arith.mulf %22, %23 : vector<16x32xf32>
    %25 = vector.broadcast %4 : vector<1x32xf32> to vector<16x32xf32>
    %26 = arith.addf %24, %25 : vector<16x32xf32>
    %27 = arith.truncf %26 : vector<16x32xf32> to vector<16x32xbf16>
    %c0_7 = arith.constant 0 : index
    %c0_8 = arith.constant 0 : index
    %28 = vector.load %arg1[%c0_7, %c0_8] : memref<480x128xbf16, #tpu.memory_space<vmem>>, vector<32x128xbf16>
    %cst_9 = arith.constant dense<0.000000e+00> : vector<16x128xf32>
    %29 = tpu.matmul %27, %28, %cst_9 {dimension_numbers = #tpu.dot_dimension_numbers<[1], [0], [0], [1], [0, 0, 1, 1], [], []>} : vector<16x32xbf16>, vector<32x128xbf16>, vector<16x128xf32> -> vector<16x128xf32>
    %30 = vector.extract_strided_slice %1 {offsets = [2, 0], sizes = [1, 128], strides = [1, 1]} : vector<34x128xf32> to vector<1x128xf32>
    %31 = vector.broadcast %30 : vector<1x128xf32> to vector<16x128xf32>
    %32 = arith.addf %29, %31 : vector<16x128xf32>
    %33 = vector.extract_strided_slice %32 {offsets = [0, 0], sizes = [16, 16], strides = [1, 1]} : vector<16x128xf32> to vector<16x16xf32>
    %34 = vector.extract_strided_slice %32 {offsets = [0, 32], sizes = [16, 16], strides = [1, 1]} : vector<16x128xf32> to vector<16x16xf32>
    %35 = vector.extract_strided_slice %32 {offsets = [0, 64], sizes = [16, 16], strides = [1, 1]} : vector<16x128xf32> to vector<16x16xf32>
    %36 = arith.truncf %33 : vector<16x16xf32> to vector<16x16xbf16>
    %37 = arith.truncf %34 : vector<16x16xf32> to vector<16x16xbf16>
    %cst_10 = arith.constant dense<0.000000e+00> : vector<16x16xf32>
    %38 = tpu.matmul %36, %37, %cst_10 {dimension_numbers = #tpu.dot_dimension_numbers<[1], [1], [0], [0], [0, 0, 1, 0], [], []>} : vector<16x16xbf16>, vector<16x16xbf16>, vector<16x16xf32> -> vector<16x16xf32>
    %39 = arith.addf %38, %2 : vector<16x16xf32>
    %cst_11 = arith.constant dense<0xFF800000> : vector<16xf32>
    %40 = vector.multi_reduction <maximumf>, %39, %cst_11 [1] : vector<16x16xf32> to vector<16xf32>
    %41 = vector.shape_cast %40 : vector<16xf32> to vector<16x1xf32>
    %42 = vector.broadcast %41 : vector<16x1xf32> to vector<16x16xf32>
    %43 = arith.subf %39, %42 : vector<16x16xf32>
    %44 = math.exp %43 : vector<16x16xf32>
    %cst_12 = arith.constant dense<0.000000e+00> : vector<16xf32>
    %45 = vector.multi_reduction <add>, %44, %cst_12 [1] : vector<16x16xf32> to vector<16xf32>
    %46 = vector.shape_cast %45 : vector<16xf32> to vector<16x1xf32>
    %47 = tpu.reciprocal %46 {approx = true} : vector<16x1xf32> -> vector<16x1xf32>
    %48 = vector.broadcast %47 : vector<16x1xf32> to vector<16x16xf32>
    %49 = arith.mulf %44, %48 : vector<16x16xf32>
    %50 = arith.truncf %49 : vector<16x16xf32> to vector<16x16xbf16>
    %51 = arith.truncf %35 : vector<16x16xf32> to vector<16x16xbf16>
    %cst_13 = arith.constant dense<0.000000e+00> : vector<16x16xf32>
    %52 = tpu.matmul %50, %51, %cst_13 {dimension_numbers = #tpu.dot_dimension_numbers<[1], [0], [0], [1], [0, 0, 1, 1], [], []>} : vector<16x16xbf16>, vector<16x16xbf16>, vector<16x16xf32> -> vector<16x16xf32>
    %53 = vector.extract_strided_slice %32 {offsets = [0, 16], sizes = [16, 16], strides = [1, 1]} : vector<16x128xf32> to vector<16x16xf32>
    %54 = vector.extract_strided_slice %32 {offsets = [0, 48], sizes = [16, 16], strides = [1, 1]} : vector<16x128xf32> to vector<16x16xf32>
    %55 = vector.extract_strided_slice %32 {offsets = [0, 80], sizes = [16, 16], strides = [1, 1]} : vector<16x128xf32> to vector<16x16xf32>
    %56 = arith.truncf %53 : vector<16x16xf32> to vector<16x16xbf16>
    %57 = arith.truncf %54 : vector<16x16xf32> to vector<16x16xbf16>
    %cst_14 = arith.constant dense<0.000000e+00> : vector<16x16xf32>
    %58 = tpu.matmul %56, %57, %cst_14 {dimension_numbers = #tpu.dot_dimension_numbers<[1], [1], [0], [0], [0, 0, 1, 0], [], []>} : vector<16x16xbf16>, vector<16x16xbf16>, vector<16x16xf32> -> vector<16x16xf32>
    %59 = arith.addf %58, %2 : vector<16x16xf32>
    %cst_15 = arith.constant dense<0xFF800000> : vector<16xf32>
    %60 = vector.multi_reduction <maximumf>, %59, %cst_15 [1] : vector<16x16xf32> to vector<16xf32>
    %61 = vector.shape_cast %60 : vector<16xf32> to vector<16x1xf32>
    %62 = vector.broadcast %61 : vector<16x1xf32> to vector<16x16xf32>
    %63 = arith.subf %59, %62 : vector<16x16xf32>
    %64 = math.exp %63 : vector<16x16xf32>
    %cst_16 = arith.constant dense<0.000000e+00> : vector<16xf32>
    %65 = vector.multi_reduction <add>, %64, %cst_16 [1] : vector<16x16xf32> to vector<16xf32>
    %66 = vector.shape_cast %65 : vector<16xf32> to vector<16x1xf32>
    %67 = tpu.reciprocal %66 {approx = true} : vector<16x1xf32> -> vector<16x1xf32>
    %68 = vector.broadcast %67 : vector<16x1xf32> to vector<16x16xf32>
    %69 = arith.mulf %64, %68 : vector<16x16xf32>
    %70 = arith.truncf %69 : vector<16x16xf32> to vector<16x16xbf16>
    %71 = arith.truncf %55 : vector<16x16xf32> to vector<16x16xbf16>
    %cst_17 = arith.constant dense<0.000000e+00> : vector<16x16xf32>
    %72 = tpu.matmul %70, %71, %cst_17 {dimension_numbers = #tpu.dot_dimension_numbers<[1], [0], [0], [1], [0, 0, 1, 1], [], []>} : vector<16x16xbf16>, vector<16x16xbf16>, vector<16x16xf32> -> vector<16x16xf32>
    %73 = tpu.concatenate %52, %72 in 1 : vector<16x16xf32>, vector<16x16xf32> -> vector<16x32xf32>
    %74 = arith.truncf %73 : vector<16x32xf32> to vector<16x32xbf16>
    %c32 = arith.constant 32 : index
    %c0_18 = arith.constant 0 : index
    %75 = vector.load %arg1[%c32, %c0_18] : memref<480x128xbf16, #tpu.memory_space<vmem>>, vector<32x128xbf16>
    %cst_19 = arith.constant dense<0.000000e+00> : vector<16x128xf32>
    %76 = tpu.matmul %74, %75, %cst_19 {dimension_numbers = #tpu.dot_dimension_numbers<[1], [0], [0], [1], [0, 0, 1, 1], [], []>} : vector<16x32xbf16>, vector<32x128xbf16>, vector<16x128xf32> -> vector<16x128xf32>
    %77 = vector.extract_strided_slice %76 {offsets = [0, 0], sizes = [16, 32], strides = [1, 1]} : vector<16x128xf32> to vector<16x32xf32>
    %78 = arith.addf %0, %77 : vector<16x32xf32>
    %79 = vector.extract_strided_slice %1 {offsets = [3, 0], sizes = [1, 32], strides = [1, 1]} : vector<34x128xf32> to vector<1x32xf32>
    %80 = vector.broadcast %79 : vector<1x32xf32> to vector<16x32xf32>
    %81 = arith.addf %78, %80 : vector<16x32xf32>
    %82 = vector.extract_strided_slice %1 {offsets = [4, 0], sizes = [1, 32], strides = [1, 1]} : vector<34x128xf32> to vector<1x32xf32>
    %83 = vector.extract_strided_slice %1 {offsets = [5, 0], sizes = [1, 32], strides = [1, 1]} : vector<34x128xf32> to vector<1x32xf32>
    %cst_20 = arith.constant dense<0.000000e+00> : vector<16xf32>
    %84 = vector.multi_reduction <add>, %81, %cst_20 [1] : vector<16x32xf32> to vector<16xf32>
    %85 = vector.shape_cast %84 : vector<16xf32> to vector<16x1xf32>
    %cst_21 = arith.constant 3.200000e+01 : f32
    %86 = vector.broadcast %cst_21 : f32 to vector<16x1xf32>
    %87 = arith.divf %85, %86 : vector<16x1xf32>
    %88 = vector.broadcast %87 : vector<16x1xf32> to vector<16x32xf32>
    %89 = arith.subf %81, %88 : vector<16x32xf32>
    %90 = arith.mulf %89, %89 : vector<16x32xf32>
    %cst_22 = arith.constant dense<0.000000e+00> : vector<16xf32>
    %91 = vector.multi_reduction <add>, %90, %cst_22 [1] : vector<16x32xf32> to vector<16xf32>
    %92 = vector.shape_cast %91 : vector<16xf32> to vector<16x1xf32>
    %cst_23 = arith.constant 3.200000e+01 : f32
    %93 = vector.broadcast %cst_23 : f32 to vector<16x1xf32>
    %94 = arith.divf %92, %93 : vector<16x1xf32>
    %95 = vector.broadcast %87 : vector<16x1xf32> to vector<16x32xf32>
    %96 = arith.subf %81, %95 : vector<16x32xf32>
    %cst_24 = arith.constant 9.99999974E-6 : f32
    %97 = vector.broadcast %cst_24 : f32 to vector<16x1xf32>
    %98 = arith.addf %94, %97 : vector<16x1xf32>
    %99 = math.rsqrt %98 : vector<16x1xf32>
    %100 = vector.broadcast %99 : vector<16x1xf32> to vector<16x32xf32>
    %101 = arith.mulf %96, %100 : vector<16x32xf32>
    %102 = vector.broadcast %82 : vector<1x32xf32> to vector<16x32xf32>
    %103 = arith.mulf %101, %102 : vector<16x32xf32>
    %104 = vector.broadcast %83 : vector<1x32xf32> to vector<16x32xf32>
    %105 = arith.addf %103, %104 : vector<16x32xf32>
    %106 = arith.truncf %105 : vector<16x32xf32> to vector<16x32xbf16>
    %c64 = arith.constant 64 : index
    %c0_25 = arith.constant 0 : index
    %107 = vector.load %arg1[%c64, %c0_25] : memref<480x128xbf16, #tpu.memory_space<vmem>>, vector<32x128xbf16>
    %cst_26 = arith.constant dense<0.000000e+00> : vector<16x128xf32>
    %108 = tpu.matmul %106, %107, %cst_26 {dimension_numbers = #tpu.dot_dimension_numbers<[1], [0], [0], [1], [0, 0, 1, 1], [], []>} : vector<16x32xbf16>, vector<32x128xbf16>, vector<16x128xf32> -> vector<16x128xf32>
    %109 = vector.extract_strided_slice %1 {offsets = [6, 0], sizes = [1, 128], strides = [1, 1]} : vector<34x128xf32> to vector<1x128xf32>
    %110 = vector.broadcast %109 : vector<1x128xf32> to vector<16x128xf32>
    %111 = arith.addf %108, %110 : vector<16x128xf32>
    %112 = arith.mulf %111, %111 : vector<16x128xf32>
    %113 = arith.mulf %111, %112 : vector<16x128xf32>
    %cst_27 = arith.constant 4.471500e-02 : f32
    %114 = vector.broadcast %cst_27 : f32 to vector<16x128xf32>
    %115 = arith.mulf %114, %113 : vector<16x128xf32>
    %116 = arith.addf %111, %115 : vector<16x128xf32>
    %cst_28 = arith.constant 0.797884583 : f32
    %117 = vector.broadcast %cst_28 : f32 to vector<16x128xf32>
    %118 = arith.mulf %117, %116 : vector<16x128xf32>
    %119 = math.tanh %118 : vector<16x128xf32>
    %cst_29 = arith.constant 1.000000e+00 : f32
    %120 = vector.broadcast %cst_29 : f32 to vector<16x128xf32>
    %121 = arith.addf %120, %119 : vector<16x128xf32>
    %cst_30 = arith.constant 5.000000e-01 : f32
    %122 = vector.broadcast %cst_30 : f32 to vector<16x128xf32>
    %123 = arith.mulf %122, %121 : vector<16x128xf32>
    %124 = arith.mulf %111, %123 : vector<16x128xf32>
    %125 = arith.truncf %124 : vector<16x128xf32> to vector<16x128xbf16>
    %c96 = arith.constant 96 : index
    %c0_31 = arith.constant 0 : index
    %126 = vector.load %arg1[%c96, %c0_31] : memref<480x128xbf16, #tpu.memory_space<vmem>>, vector<128x128xbf16>
    %cst_32 = arith.constant dense<0.000000e+00> : vector<16x128xf32>
    %127 = tpu.matmul %125, %126, %cst_32 {dimension_numbers = #tpu.dot_dimension_numbers<[1], [0], [0], [1], [0, 0, 1, 1], [], []>} : vector<16x128xbf16>, vector<128x128xbf16>, vector<16x128xf32> -> vector<16x128xf32>
    %128 = vector.extract_strided_slice %127 {offsets = [0, 0], sizes = [16, 32], strides = [1, 1]} : vector<16x128xf32> to vector<16x32xf32>
    %129 = arith.addf %81, %128 : vector<16x32xf32>
    %130 = vector.extract_strided_slice %1 {offsets = [7, 0], sizes = [1, 32], strides = [1, 1]} : vector<34x128xf32> to vector<1x32xf32>
    %131 = vector.broadcast %130 : vector<1x32xf32> to vector<16x32xf32>
    %132 = arith.addf %129, %131 : vector<16x32xf32>
    %133 = vector.extract_strided_slice %1 {offsets = [8, 0], sizes = [1, 32], strides = [1, 1]} : vector<34x128xf32> to vector<1x32xf32>
    %134 = vector.extract_strided_slice %1 {offsets = [9, 0], sizes = [1, 32], strides = [1, 1]} : vector<34x128xf32> to vector<1x32xf32>
    %cst_33 = arith.constant dense<0.000000e+00> : vector<16xf32>
    %135 = vector.multi_reduction <add>, %132, %cst_33 [1] : vector<16x32xf32> to vector<16xf32>
    %136 = vector.shape_cast %135 : vector<16xf32> to vector<16x1xf32>
    %cst_34 = arith.constant 3.200000e+01 : f32
    %137 = vector.broadcast %cst_34 : f32 to vector<16x1xf32>
    %138 = arith.divf %136, %137 : vector<16x1xf32>
    %139 = vector.broadcast %138 : vector<16x1xf32> to vector<16x32xf32>
    %140 = arith.subf %132, %139 : vector<16x32xf32>
    %141 = arith.mulf %140, %140 : vector<16x32xf32>
    %cst_35 = arith.constant dense<0.000000e+00> : vector<16xf32>
    %142 = vector.multi_reduction <add>, %141, %cst_35 [1] : vector<16x32xf32> to vector<16xf32>
    %143 = vector.shape_cast %142 : vector<16xf32> to vector<16x1xf32>
    %cst_36 = arith.constant 3.200000e+01 : f32
    %144 = vector.broadcast %cst_36 : f32 to vector<16x1xf32>
    %145 = arith.divf %143, %144 : vector<16x1xf32>
    %146 = vector.broadcast %138 : vector<16x1xf32> to vector<16x32xf32>
    %147 = arith.subf %132, %146 : vector<16x32xf32>
    %cst_37 = arith.constant 9.99999974E-6 : f32
    %148 = vector.broadcast %cst_37 : f32 to vector<16x1xf32>
    %149 = arith.addf %145, %148 : vector<16x1xf32>
    %150 = math.rsqrt %149 : vector<16x1xf32>
    %151 = vector.broadcast %150 : vector<16x1xf32> to vector<16x32xf32>
    %152 = arith.mulf %147, %151 : vector<16x32xf32>
    %153 = vector.broadcast %133 : vector<1x32xf32> to vector<16x32xf32>
    %154 = arith.mulf %152, %153 : vector<16x32xf32>
    %155 = vector.broadcast %134 : vector<1x32xf32> to vector<16x32xf32>
    %156 = arith.addf %154, %155 : vector<16x32xf32>
    %157 = arith.truncf %156 : vector<16x32xf32> to vector<16x32xbf16>
    %c224 = arith.constant 224 : index
    %c0_38 = arith.constant 0 : index
    %158 = vector.load %arg1[%c224, %c0_38] : memref<480x128xbf16, #tpu.memory_space<vmem>>, vector<32x128xbf16>
    %cst_39 = arith.constant dense<0.000000e+00> : vector<16x128xf32>
    %159 = tpu.matmul %157, %158, %cst_39 {dimension_numbers = #tpu.dot_dimension_numbers<[1], [0], [0], [1], [0, 0, 1, 1], [], []>} : vector<16x32xbf16>, vector<32x128xbf16>, vector<16x128xf32> -> vector<16x128xf32>
    %160 = vector.extract_strided_slice %1 {offsets = [10, 0], sizes = [1, 128], strides = [1, 1]} : vector<34x128xf32> to vector<1x128xf32>
    %161 = vector.broadcast %160 : vector<1x128xf32> to vector<16x128xf32>
    %162 = arith.addf %159, %161 : vector<16x128xf32>
    %163 = vector.extract_strided_slice %162 {offsets = [0, 0], sizes = [16, 16], strides = [1, 1]} : vector<16x128xf32> to vector<16x16xf32>
    %164 = vector.extract_strided_slice %162 {offsets = [0, 32], sizes = [16, 16], strides = [1, 1]} : vector<16x128xf32> to vector<16x16xf32>
    %165 = vector.extract_strided_slice %162 {offsets = [0, 64], sizes = [16, 16], strides = [1, 1]} : vector<16x128xf32> to vector<16x16xf32>
    %166 = arith.truncf %163 : vector<16x16xf32> to vector<16x16xbf16>
    %167 = arith.truncf %164 : vector<16x16xf32> to vector<16x16xbf16>
    %cst_40 = arith.constant dense<0.000000e+00> : vector<16x16xf32>
    %168 = tpu.matmul %166, %167, %cst_40 {dimension_numbers = #tpu.dot_dimension_numbers<[1], [1], [0], [0], [0, 0, 1, 0], [], []>} : vector<16x16xbf16>, vector<16x16xbf16>, vector<16x16xf32> -> vector<16x16xf32>
    %169 = arith.addf %168, %2 : vector<16x16xf32>
    %cst_41 = arith.constant dense<0xFF800000> : vector<16xf32>
    %170 = vector.multi_reduction <maximumf>, %169, %cst_41 [1] : vector<16x16xf32> to vector<16xf32>
    %171 = vector.shape_cast %170 : vector<16xf32> to vector<16x1xf32>
    %172 = vector.broadcast %171 : vector<16x1xf32> to vector<16x16xf32>
    %173 = arith.subf %169, %172 : vector<16x16xf32>
    %174 = math.exp %173 : vector<16x16xf32>
    %cst_42 = arith.constant dense<0.000000e+00> : vector<16xf32>
    %175 = vector.multi_reduction <add>, %174, %cst_42 [1] : vector<16x16xf32> to vector<16xf32>
    %176 = vector.shape_cast %175 : vector<16xf32> to vector<16x1xf32>
    %177 = tpu.reciprocal %176 {approx = true} : vector<16x1xf32> -> vector<16x1xf32>
    %178 = vector.broadcast %177 : vector<16x1xf32> to vector<16x16xf32>
    %179 = arith.mulf %174, %178 : vector<16x16xf32>
    %180 = arith.truncf %179 : vector<16x16xf32> to vector<16x16xbf16>
    %181 = arith.truncf %165 : vector<16x16xf32> to vector<16x16xbf16>
    %cst_43 = arith.constant dense<0.000000e+00> : vector<16x16xf32>
    %182 = tpu.matmul %180, %181, %cst_43 {dimension_numbers = #tpu.dot_dimension_numbers<[1], [0], [0], [1], [0, 0, 1, 1], [], []>} : vector<16x16xbf16>, vector<16x16xbf16>, vector<16x16xf32> -> vector<16x16xf32>
    %183 = vector.extract_strided_slice %162 {offsets = [0, 16], sizes = [16, 16], strides = [1, 1]} : vector<16x128xf32> to vector<16x16xf32>
    %184 = vector.extract_strided_slice %162 {offsets = [0, 48], sizes = [16, 16], strides = [1, 1]} : vector<16x128xf32> to vector<16x16xf32>
    %185 = vector.extract_strided_slice %162 {offsets = [0, 80], sizes = [16, 16], strides = [1, 1]} : vector<16x128xf32> to vector<16x16xf32>
    %186 = arith.truncf %183 : vector<16x16xf32> to vector<16x16xbf16>
    %187 = arith.truncf %184 : vector<16x16xf32> to vector<16x16xbf16>
    %cst_44 = arith.constant dense<0.000000e+00> : vector<16x16xf32>
    %188 = tpu.matmul %186, %187, %cst_44 {dimension_numbers = #tpu.dot_dimension_numbers<[1], [1], [0], [0], [0, 0, 1, 0], [], []>} : vector<16x16xbf16>, vector<16x16xbf16>, vector<16x16xf32> -> vector<16x16xf32>
    %189 = arith.addf %188, %2 : vector<16x16xf32>
    %cst_45 = arith.constant dense<0xFF800000> : vector<16xf32>
    %190 = vector.multi_reduction <maximumf>, %189, %cst_45 [1] : vector<16x16xf32> to vector<16xf32>
    %191 = vector.shape_cast %190 : vector<16xf32> to vector<16x1xf32>
    %192 = vector.broadcast %191 : vector<16x1xf32> to vector<16x16xf32>
    %193 = arith.subf %189, %192 : vector<16x16xf32>
    %194 = math.exp %193 : vector<16x16xf32>
    %cst_46 = arith.constant dense<0.000000e+00> : vector<16xf32>
    %195 = vector.multi_reduction <add>, %194, %cst_46 [1] : vector<16x16xf32> to vector<16xf32>
    %196 = vector.shape_cast %195 : vector<16xf32> to vector<16x1xf32>
    %197 = tpu.reciprocal %196 {approx = true} : vector<16x1xf32> -> vector<16x1xf32>
    %198 = vector.broadcast %197 : vector<16x1xf32> to vector<16x16xf32>
    %199 = arith.mulf %194, %198 : vector<16x16xf32>
    %200 = arith.truncf %199 : vector<16x16xf32> to vector<16x16xbf16>
    %201 = arith.truncf %185 : vector<16x16xf32> to vector<16x16xbf16>
    %cst_47 = arith.constant dense<0.000000e+00> : vector<16x16xf32>
    %202 = tpu.matmul %200, %201, %cst_47 {dimension_numbers = #tpu.dot_dimension_numbers<[1], [0], [0], [1], [0, 0, 1, 1], [], []>} : vector<16x16xbf16>, vector<16x16xbf16>, vector<16x16xf32> -> vector<16x16xf32>
    %203 = tpu.concatenate %182, %202 in 1 : vector<16x16xf32>, vector<16x16xf32> -> vector<16x32xf32>
    %204 = arith.truncf %203 : vector<16x32xf32> to vector<16x32xbf16>
    %c256 = arith.constant 256 : index
    %c0_48 = arith.constant 0 : index
    %205 = vector.load %arg1[%c256, %c0_48] : memref<480x128xbf16, #tpu.memory_space<vmem>>, vector<32x128xbf16>
    %cst_49 = arith.constant dense<0.000000e+00> : vector<16x128xf32>
    %206 = tpu.matmul %204, %205, %cst_49 {dimension_numbers = #tpu.dot_dimension_numbers<[1], [0], [0], [1], [0, 0, 1, 1], [], []>} : vector<16x32xbf16>, vector<32x128xbf16>, vector<16x128xf32> -> vector<16x128xf32>
    %207 = vector.extract_strided_slice %206 {offsets = [0, 0], sizes = [16, 32], strides = [1, 1]} : vector<16x128xf32> to vector<16x32xf32>
    %208 = arith.addf %132, %207 : vector<16x32xf32>
    %209 = vector.extract_strided_slice %1 {offsets = [11, 0], sizes = [1, 32], strides = [1, 1]} : vector<34x128xf32> to vector<1x32xf32>
    %210 = vector.broadcast %209 : vector<1x32xf32> to vector<16x32xf32>
    %211 = arith.addf %208, %210 : vector<16x32xf32>
    %212 = vector.extract_strided_slice %1 {offsets = [12, 0], sizes = [1, 32], strides = [1, 1]} : vector<34x128xf32> to vector<1x32xf32>
    %213 = vector.extract_strided_slice %1 {offsets = [13, 0], sizes = [1, 32], strides = [1, 1]} : vector<34x128xf32> to vector<1x32xf32>
    %cst_50 = arith.constant dense<0.000000e+00> : vector<16xf32>
    %214 = vector.multi_reduction <add>, %211, %cst_50 [1] : vector<16x32xf32> to vector<16xf32>
    %215 = vector.shape_cast %214 : vector<16xf32> to vector<16x1xf32>
    %cst_51 = arith.constant 3.200000e+01 : f32
    %216 = vector.broadcast %cst_51 : f32 to vector<16x1xf32>
    %217 = arith.divf %215, %216 : vector<16x1xf32>
    %218 = vector.broadcast %217 : vector<16x1xf32> to vector<16x32xf32>
    %219 = arith.subf %211, %218 : vector<16x32xf32>
    %220 = arith.mulf %219, %219 : vector<16x32xf32>
    %cst_52 = arith.constant dense<0.000000e+00> : vector<16xf32>
    %221 = vector.multi_reduction <add>, %220, %cst_52 [1] : vector<16x32xf32> to vector<16xf32>
    %222 = vector.shape_cast %221 : vector<16xf32> to vector<16x1xf32>
    %cst_53 = arith.constant 3.200000e+01 : f32
    %223 = vector.broadcast %cst_53 : f32 to vector<16x1xf32>
    %224 = arith.divf %222, %223 : vector<16x1xf32>
    %225 = vector.broadcast %217 : vector<16x1xf32> to vector<16x32xf32>
    %226 = arith.subf %211, %225 : vector<16x32xf32>
    %cst_54 = arith.constant 9.99999974E-6 : f32
    %227 = vector.broadcast %cst_54 : f32 to vector<16x1xf32>
    %228 = arith.addf %224, %227 : vector<16x1xf32>
    %229 = math.rsqrt %228 : vector<16x1xf32>
    %230 = vector.broadcast %229 : vector<16x1xf32> to vector<16x32xf32>
    %231 = arith.mulf %226, %230 : vector<16x32xf32>
    %232 = vector.broadcast %212 : vector<1x32xf32> to vector<16x32xf32>
    %233 = arith.mulf %231, %232 : vector<16x32xf32>
    %234 = vector.broadcast %213 : vector<1x32xf32> to vector<16x32xf32>
    %235 = arith.addf %233, %234 : vector<16x32xf32>
    %236 = arith.truncf %235 : vector<16x32xf32> to vector<16x32xbf16>
    %c288 = arith.constant 288 : index
    %c0_55 = arith.constant 0 : index
    %237 = vector.load %arg1[%c288, %c0_55] : memref<480x128xbf16, #tpu.memory_space<vmem>>, vector<32x128xbf16>
    %cst_56 = arith.constant dense<0.000000e+00> : vector<16x128xf32>
    %238 = tpu.matmul %236, %237, %cst_56 {dimension_numbers = #tpu.dot_dimension_numbers<[1], [0], [0], [1], [0, 0, 1, 1], [], []>} : vector<16x32xbf16>, vector<32x128xbf16>, vector<16x128xf32> -> vector<16x128xf32>
    %239 = vector.extract_strided_slice %1 {offsets = [14, 0], sizes = [1, 128], strides = [1, 1]} : vector<34x128xf32> to vector<1x128xf32>
    %240 = vector.broadcast %239 : vector<1x128xf32> to vector<16x128xf32>
    %241 = arith.addf %238, %240 : vector<16x128xf32>
    %242 = arith.mulf %241, %241 : vector<16x128xf32>
    %243 = arith.mulf %241, %242 : vector<16x128xf32>
    %cst_57 = arith.constant 4.471500e-02 : f32
    %244 = vector.broadcast %cst_57 : f32 to vector<16x128xf32>
    %245 = arith.mulf %244, %243 : vector<16x128xf32>
    %246 = arith.addf %241, %245 : vector<16x128xf32>
    %cst_58 = arith.constant 0.797884583 : f32
    %247 = vector.broadcast %cst_58 : f32 to vector<16x128xf32>
    %248 = arith.mulf %247, %246 : vector<16x128xf32>
    %249 = math.tanh %248 : vector<16x128xf32>
    %cst_59 = arith.constant 1.000000e+00 : f32
    %250 = vector.broadcast %cst_59 : f32 to vector<16x128xf32>
    %251 = arith.addf %250, %249 : vector<16x128xf32>
    %cst_60 = arith.constant 5.000000e-01 : f32
    %252 = vector.broadcast %cst_60 : f32 to vector<16x128xf32>
    %253 = arith.mulf %252, %251 : vector<16x128xf32>
    %254 = arith.mulf %241, %253 : vector<16x128xf32>
    %255 = arith.truncf %254 : vector<16x128xf32> to vector<16x128xbf16>
    %c320 = arith.constant 320 : index
    %c0_61 = arith.constant 0 : index
    %256 = vector.load %arg1[%c320, %c0_61] : memref<480x128xbf16, #tpu.memory_space<vmem>>, vector<128x128xbf16>
    %cst_62 = arith.constant dense<0.000000e+00> : vector<16x128xf32>
    %257 = tpu.matmul %255, %256, %cst_62 {dimension_numbers = #tpu.dot_dimension_numbers<[1], [0], [0], [1], [0, 0, 1, 1], [], []>} : vector<16x128xbf16>, vector<128x128xbf16>, vector<16x128xf32> -> vector<16x128xf32>
    %258 = vector.extract_strided_slice %257 {offsets = [0, 0], sizes = [16, 32], strides = [1, 1]} : vector<16x128xf32> to vector<16x32xf32>
    %259 = arith.addf %211, %258 : vector<16x32xf32>
    %260 = vector.extract_strided_slice %1 {offsets = [15, 0], sizes = [1, 32], strides = [1, 1]} : vector<34x128xf32> to vector<1x32xf32>
    %261 = vector.broadcast %260 : vector<1x32xf32> to vector<16x32xf32>
    %262 = arith.addf %259, %261 : vector<16x32xf32>
    %263 = vector.extract_strided_slice %1 {offsets = [16, 0], sizes = [1, 32], strides = [1, 1]} : vector<34x128xf32> to vector<1x32xf32>
    %264 = vector.extract_strided_slice %1 {offsets = [17, 0], sizes = [1, 32], strides = [1, 1]} : vector<34x128xf32> to vector<1x32xf32>
    %cst_63 = arith.constant dense<0.000000e+00> : vector<16xf32>
    %265 = vector.multi_reduction <add>, %262, %cst_63 [1] : vector<16x32xf32> to vector<16xf32>
    %266 = vector.shape_cast %265 : vector<16xf32> to vector<16x1xf32>
    %cst_64 = arith.constant 3.200000e+01 : f32
    %267 = vector.broadcast %cst_64 : f32 to vector<16x1xf32>
    %268 = arith.divf %266, %267 : vector<16x1xf32>
    %269 = vector.broadcast %268 : vector<16x1xf32> to vector<16x32xf32>
    %270 = arith.subf %262, %269 : vector<16x32xf32>
    %271 = arith.mulf %270, %270 : vector<16x32xf32>
    %cst_65 = arith.constant dense<0.000000e+00> : vector<16xf32>
    %272 = vector.multi_reduction <add>, %271, %cst_65 [1] : vector<16x32xf32> to vector<16xf32>
    %273 = vector.shape_cast %272 : vector<16xf32> to vector<16x1xf32>
    %cst_66 = arith.constant 3.200000e+01 : f32
    %274 = vector.broadcast %cst_66 : f32 to vector<16x1xf32>
    %275 = arith.divf %273, %274 : vector<16x1xf32>
    %276 = vector.broadcast %268 : vector<16x1xf32> to vector<16x32xf32>
    %277 = arith.subf %262, %276 : vector<16x32xf32>
    %cst_67 = arith.constant 9.99999974E-6 : f32
    %278 = vector.broadcast %cst_67 : f32 to vector<16x1xf32>
    %279 = arith.addf %275, %278 : vector<16x1xf32>
    %280 = math.rsqrt %279 : vector<16x1xf32>
    %281 = vector.broadcast %280 : vector<16x1xf32> to vector<16x32xf32>
    %282 = arith.mulf %277, %281 : vector<16x32xf32>
    %283 = vector.broadcast %263 : vector<1x32xf32> to vector<16x32xf32>
    %284 = arith.mulf %282, %283 : vector<16x32xf32>
    %285 = vector.broadcast %264 : vector<1x32xf32> to vector<16x32xf32>
    %286 = arith.addf %284, %285 : vector<16x32xf32>
    %287 = arith.truncf %286 : vector<16x32xf32> to vector<16x32xbf16>
    %c448 = arith.constant 448 : index
    %c0_68 = arith.constant 0 : index
    %288 = vector.load %arg1[%c448, %c0_68] : memref<480x128xbf16, #tpu.memory_space<vmem>>, vector<32x128xbf16>
    %cst_69 = arith.constant dense<0.000000e+00> : vector<16x128xf32>
    %289 = tpu.matmul %287, %288, %cst_69 {dimension_numbers = #tpu.dot_dimension_numbers<[1], [0], [0], [1], [0, 0, 1, 1], [], []>} : vector<16x32xbf16>, vector<32x128xbf16>, vector<16x128xf32> -> vector<16x128xf32>
    %c0_70 = arith.constant 0 : index
    %c0_71 = arith.constant 0 : index
    %290 = vector.load %arg3[%c0_70, %c0_71] : memref<16x128xf32, #tpu.memory_space<vmem>>, vector<16x128xf32>
    tpu.vector_store %arg3[%c0_70, %c0_71], %289 {strides = array<i32>} : memref<16x128xf32, #tpu.memory_space<vmem>>, vector<16x128xf32>,
    return
  }
}

</mosaic_0001>

<llo_original>
// kernel: transformer_forward.1
$region0: #{transformer_forward.1}
  #allocation0 [shape = 'u32[]', space=smem, size = 0x4, offset = 0x4, fixed_abs, tag = 'smem constant byte address 0x4 - core index']
  #allocation1 [shape = 'u32[144,128]{1,0:T(1,128)}', space=vmem, size = 0x12000, scoped, tag = 'internal scratch']
  %s0 = inlined_call_operand.vmem [shape: f32[16,32], index: 0, kind: input, shape index: {}]
  %s1 = inlined_call_operand.vmem [shape: bf16[480,128], index: 1, kind: input, shape index: {}]
  %s2 = inlined_call_operand.vmem [shape: f32[34,128], index: 2, kind: input, shape index: {}]
  %s3 = inlined_call_operand.vmem [shape: f32[16,128], index: 3, kind: output, shape index: {}]
  %s4 = sld [smem:[#allocation0]]
  $region22: #{transformer_forward.1} parent=0
    _
  %s6 = ssub.s32 1, %s4
  %s7 = scalar_select 0, %s6, %s4
  // Predicated region
  $region2: #{transformer_forward.1} parent=0 // pred_check
    _
  $region3: #{transformer_forward.1} parent=0 // pred_check_branch
    %9 = sbr.rel (0) target = $region5
  $region4: #{transformer_forward.1} parent=0 // pred_region
    _
  $region5: #{transformer_forward.1} parent=0 // pred_fallthru
    _
  // Predicated region
  $region6: #{transformer_forward.1} parent=0 // pred_check
    _
  $region7: #{transformer_forward.1} parent=0 // pred_check_branch
    %11 = sbr.rel (0) target = $region9
  $region8: #{transformer_forward.1} parent=0 // pred_region
    _
  $region9: #{transformer_forward.1} parent=0 // pred_fallthru
    _
  // Predicated region
  $region10: #{transformer_forward.1} parent=0 // pred_check
    _
  $region11: #{transformer_forward.1} parent=0 // pred_check_branch
    %13 = sbr.rel (0) target = $region13
  $region12: #{transformer_forward.1} parent=0 // pred_region
    _
  $region13: #{transformer_forward.1} parent=0 // pred_fallthru
    _
  %v15 = vld [vmem:[%s0] sm:$0xff]
  %v16 = vld [vmem:[%s0 + $0x8] sm:$0xff]
  %v17 = vld [vmem:[%s2] sm:$0xff]
  %v18 = vld [vmem:[%s2 + $0x8] sm:$0xff]
  %v19 = vld [vmem:[%s2 + $0x10] sm:$0xff]
  %v20 = vld [vmem:[%s2 + $0x18] sm:$0xff]
  %v21 = vld [vmem:[%s2 + $0x20] sm:$0x3]
  %vm22 = vcmask 261120
  %v23 = vsel %vm22, %v15, 0.0
  %24 = vadd.xlane.f32.xlu0 %v23
  %v25 = vpop.xlane.xlu0 %24
  %v26 = vsel %vm22, %v16, 0.0
  %27 = vadd.xlane.f32.xlu0 %v26
  %v28 = vpop.xlane.xlu0 %27
  %v29 = vrcp.pop 32.0
  %v30 = vmul.f32 %v25, %v29
  %v31 = vmul.f32 %v28, %v29
  %v32 = vsub.f32 %v15, %v30
  %v33 = vsub.f32 %v16, %v31
  %v34 = vmul.f32 %v32, %v32
  %v35 = vmul.f32 %v33, %v33
  %v36 = vsel %vm22, %v34, 0.0
  %37 = vadd.xlane.f32.xlu0 %v36
  %v38 = vpop.xlane.xlu0 %37
  %v39 = vsel %vm22, %v35, 0.0
  %40 = vadd.xlane.f32.xlu0 %v39
  %v41 = vpop.xlane.xlu0 %40
  %v42 = vmul.f32 %v38, %v29
  %v43 = vmul.f32 %v41, %v29
  %v44 = vadd.f32 %v42, 1e-05
  %v45 = vadd.f32 %v43, 1e-05
  %v46 = vrsqrt.pop %v44
  %v47 = vrsqrt.pop %v45
  %v48 = vmul.f32 %v32, %v46
  %v49 = vmul.f32 %v33, %v47
  %v50 = vlaneseq
  %v51 = vshrl.u32 %v50, 7
  %v52 = vsub.s32 0, %v51
  %v53 = vrot.slane %v17, %v52
  %v54 = vmul.f32 %v48, %v53
  %v55 = vmul.f32 %v49, %v53
  %v56 = vlaneseq
  %v57 = vshrl.u32 %v56, 7
  %v58 = vsub.s32 1, %v57
  %v59 = vrot.slane %v17, %v58
  %v60 = vadd.f32 %v54, %v59
  %v61 = vadd.f32 %v55, %v59
  %v62 = vpack.c.bf16 %v61, %v60
  %v63 = vld [vmem:[%s1] sm:$0xf]
  %v64 = vld [vmem:[%s1 + $0x4] sm:$0xf]
  %v65 = vld [vmem:[%s1 + $0x8] sm:$0xf]
  %v66 = vld [vmem:[%s1 + $0xc] sm:$0xf]
  %v67 = vlaneseq
  %v68 = vshrl.u32 %v67, 7
  %v69 = vsub.s32 2, %v68
  %v70 = vrot.slane %v17, %v69
  %v75 = vunpack.c.l.b16 %v63
  %v76 = vunpack.c.l.b16 %v64
  %v77 = vunpack.c.l.b16 %v65
  %v78 = vunpack.c.l.b16 %v66
  %v79 = vpack.c.b16 %v76, %v75
  %v80 = vpack.c.b16 %v78, %v77
  %v84 = vsel %vm22, %v62, 0
  %86 = vmatprep.subr.bf16.mxu0 0
  %87 = vmatpush1.bf16.msra.mxu0 %v79
  %88 = vmatprep.subr.bf16.mxu0 0
  %89 = vmatpush1.bf16.msra.mxu0 %v80
  %90 = vmatprep.subr.bf16.mxu0 0
  %91 = vmatpush1.bf16.msra.mxu0 0
  %92 = vmatprep.subr.bf16.mxu0 0
  %93 = vmatpush1.bf16.msra.mxu0 0
  %94 = vmatprep.subr.bf16.mxu0 0
  %95 = vmatpush1.bf16.msra.mxu0 0
  %96 = vmatprep.subr.bf16.mxu0 0
  %97 = vmatpush1.bf16.msra.mxu0 0
  %98 = vmatprep.subr.bf16.mxu0 0
  %99 = vmatpush1.bf16.msra.mxu0 0
  %100 = vmatprep.subr.bf16.mxu0 0
  %101 = vmatpush1.bf16.msra.mxu0 0
  %102 = vmatprep.subr.bf16.mxu0 0
  %103 = vmatpush1.bf16.msra.mxu0 0
  %104 = vmatprep.subr.bf16.mxu0 0
  %105 = vmatpush1.bf16.msra.mxu0 0
  %106 = vmatprep.subr.bf16.mxu0 0
  %107 = vmatpush1.bf16.msra.mxu0 0
  %108 = vmatprep.subr.bf16.mxu0 0
  %109 = vmatpush1.bf16.msra.mxu0 0
  %110 = vmatprep.subr.bf16.mxu0 0
  %111 = vmatpush1.bf16.msra.mxu0 0
  %112 = vmatprep.subr.bf16.mxu0 0
  %113 = vmatpush1.bf16.msra.mxu0 0
  %114 = vmatprep.subr.bf16.mxu0 0
  %115 = vmatpush1.bf16.msra.mxu0 0
  %116 = vmatprep.subr.bf16.mxu0 0
  %117 = vmatpush1.bf16.msra.mxu0 0
  %118 = vmatprep.mubr.bf16.mxu0 0
  %119 = vmatmul.mubr.bf16.gmra.mrb[0].mxu0 %v84
  %v120 = vpop.f32.mrb[0].mxu0
  %v121 = vadd.f32 %v70, %v120
  %v122 = vpop.f32.mrb[0].mxu0
  %v123 = vpop.f32.mrb[0].mxu0
  %v124 = vadd.f32 %v70, %v123
  %v125 = vpop.f32.mrb[0].mxu0
  %126 = vdwg.mxu0
  %v127 = vpack.c.bf16 %v124, %v121
  %129 = vrot.lane.b32.xlu0 %v127, 96
  %v130 = vpop.permute.xlu0 %129
  %vm134 = vcmask 1045504
  %v135 = vrot.slane %v19, 2
  %v136 = vrot.slane %v20, 2
  %v137 = vsel %vm134, %v135, %v136
  %v138 = vrot.slane %v21, 2
  %v139 = vsel %vm134, %v136, %v138
  %vm142 = vcmask 130048
  %v144 = vsel %vm142, %v127, 0
  %v147 = vsel %vm142, %v130, 0
  %149 = vmatprep.subr.bf16.mxu0 0
  %150 = vmatpush1.bf16.xpose.msra.mxu0 %v147
  %151 = vmatprep.subr.bf16.mxu0 0
  %152 = vmatpush1.bf16.xpose.msra.mxu0 0
  %153 = vmatprep.subr.bf16.mxu0 0
  %154 = vmatpush1.bf16.xpose.msra.mxu0 0
  %155 = vmatprep.subr.bf16.mxu0 0
  %156 = vmatpush1.bf16.xpose.msra.mxu0 0
  %157 = vmatprep.subr.bf16.mxu0 0
  %158 = vmatpush1.bf16.xpose.msra.mxu0 0
  %159 = vmatprep.subr.bf16.mxu0 0
  %160 = vmatpush1.bf16.xpose.msra.mxu0 0
  %161 = vmatprep.subr.bf16.mxu0 0
  %162 = vmatpush1.bf16.xpose.msra.mxu0 0
  %163 = vmatprep.subr.bf16.mxu0 0
  %164 = vmatpush1.bf16.xpose.msra.mxu0 0
  %165 = vmatprep.subr.bf16.mxu0 0
  %166 = vmatpush1.bf16.xpose.msra.mxu0 0
  %167 = vmatprep.subr.bf16.mxu0 0
  %168 = vmatpush1.bf16.xpose.msra.mxu0 0
  %169 = vmatprep.subr.bf16.mxu0 0
  %170 = vmatpush1.bf16.xpose.msra.mxu0 0
  %171 = vmatprep.subr.bf16.mxu0 0
  %172 = vmatpush1.bf16.xpose.msra.mxu0 0
  %173 = vmatprep.subr.bf16.mxu0 0
  %174 = vmatpush1.bf16.xpose.msra.mxu0 0
  %175 = vmatprep.subr.bf16.mxu0 0
  %176 = vmatpush1.bf16.xpose.msra.mxu0 0
  %177 = vmatprep.subr.bf16.mxu0 0
  %178 = vmatpush1.bf16.xpose.msra.mxu0 0
  %179 = vmatprep.subr.bf16.mxu0 0
  %180 = vmatpush1.bf16.xpose.msra.mxu0 0
  %181 = vmatprep.mubr.bf16.mxu0 0
  %182 = vmatmul.mubr.bf16.gmra.mrb[0].mxu0 %v144
  %v183 = vpop.f32.mrb[0].mxu0
  %v184 = vadd.f32 %v137, %v183
  %v185 = vpop.f32.mrb[0].mxu0
  %v186 = vpop.f32.mrb[0].mxu0
  %v187 = vadd.f32 %v139, %v186
  %v188 = vpop.f32.mrb[0].mxu0
  %189 = vdwg.mxu0
  %v190 = vsel %vm142, %v184, -inf
  %191 = vmax.xlane.f32.xlu0 %v190
  %v192 = vpop.xlane.xlu0 %191
  %v193 = vsel %vm142, %v187, -inf
  %194 = vmax.xlane.f32.xlu0 %v193
  %v195 = vpop.xlane.xlu0 %194
  %v196 = vsub.f32 %v184, %v192
  %v197 = vsub.f32 %v187, %v195
  %v198 = vmul.f32 %v196, 1.442695
  %v199 = vpow.pop %v198
  %v200 = vmul.f32 %v197, 1.442695
  %v201 = vpow.pop %v200
  %v202 = vsel %vm142, %v199, 0.0
  %203 = vadd.xlane.f32.xlu0 %v202
  %v204 = vpop.xlane.xlu0 %203
  %v205 = vsel %vm142, %v201, 0.0
  %206 = vadd.xlane.f32.xlu0 %v205
  %v207 = vpop.xlane.xlu0 %206
  %v208 = vrcp.pop %v204
  %v209 = vrcp.pop %v207
  %v210 = vmul.f32 %v199, %v208
  %v211 = vmul.f32 %v201, %v209
  %v212 = vpack.c.bf16 %v211, %v210
  %213 = vrot.lane.b32.xlu0 %v127, 64
  %v214 = vpop.permute.xlu0 %213
  %v217 = vsel %vm142, %v212, 0
  %219 = vmatprep.subr.bf16.mxu0 0
  %220 = vmatpush1.bf16.msra.mxu0 %v214
  %221 = vmatprep.subr.bf16.mxu0 0
  %222 = vmatpush1.bf16.msra.mxu0 0
  %223 = vmatprep.subr.bf16.mxu0 0
  %224 = vmatpush1.bf16.msra.mxu0 0
  %225 = vmatprep.subr.bf16.mxu0 0
  %226 = vmatpush1.bf16.msra.mxu0 0
  %227 = vmatprep.subr.bf16.mxu0 0
  %228 = vmatpush1.bf16.msra.mxu0 0
  %229 = vmatprep.subr.bf16.mxu0 0
  %230 = vmatpush1.bf16.msra.mxu0 0
  %231 = vmatprep.subr.bf16.mxu0 0
  %232 = vmatpush1.bf16.msra.mxu0 0
  %233 = vmatprep.subr.bf16.mxu0 0
  %234 = vmatpush1.bf16.msra.mxu0 0
  %235 = vmatprep.subr.bf16.mxu0 0
  %236 = vmatpush1.bf16.msra.mxu0 0
  %237 = vmatprep.subr.bf16.mxu0 0
  %238 = vmatpush1.bf16.msra.mxu0 0
  %239 = vmatprep.subr.bf16.mxu0 0
  %240 = vmatpush1.bf16.msra.mxu0 0
  %241 = vmatprep.subr.bf16.mxu0 0
  %242 = vmatpush1.bf16.msra.mxu0 0
  %243 = vmatprep.subr.bf16.mxu0 0
  %244 = vmatpush1.bf16.msra.mxu0 0
  %245 = vmatprep.subr.bf16.mxu0 0
  %246 = vmatpush1.bf16.msra.mxu0 0
  %247 = vmatprep.subr.bf16.mxu0 0
  %248 = vmatpush1.bf16.msra.mxu0 0
  %249 = vmatprep.subr.bf16.mxu0 0
  %250 = vmatpush1.bf16.msra.mxu0 0
  %251 = vmatprep.mubr.bf16.mxu0 0
  %252 = vmatmul.mubr.bf16.gmra.mrb[0].mxu0 %v217
  %v253 = vpop.f32.mrb[0].mxu0
  %v254 = vadd.f32 0.0, %v253
  %v255 = vpop.f32.mrb[0].mxu0
  %v256 = vpop.f32.mrb[0].mxu0
  %v257 = vadd.f32 0.0, %v256
  %v258 = vpop.f32.mrb[0].mxu0
  %259 = vdwg.mxu0
  %260 = vrot.lane.b32.xlu0 %v127, 112
  %v261 = vpop.permute.xlu0 %260
  %262 = vrot.lane.b32.xlu0 %v127, 80
  %v263 = vpop.permute.xlu0 %262
  %v265 = vsel %vm142, %v261, 0
  %v268 = vsel %vm142, %v263, 0
  %270 = vmatprep.subr.bf16.mxu0 0
  %271 = vmatpush1.bf16.xpose.msra.mxu0 %v268
  %272 = vmatprep.subr.bf16.mxu0 0
  %273 = vmatpush1.bf16.xpose.msra.mxu0 0
  %274 = vmatprep.subr.bf16.mxu0 0
  %275 = vmatpush1.bf16.xpose.msra.mxu0 0
  %276 = vmatprep.subr.bf16.mxu0 0
  %277 = vmatpush1.bf16.xpose.msra.mxu0 0
  %278 = vmatprep.subr.bf16.mxu0 0
  %279 = vmatpush1.bf16.xpose.msra.mxu0 0
  %280 = vmatprep.subr.bf16.mxu0 0
  %281 = vmatpush1.bf16.xpose.msra.mxu0 0
  %282 = vmatprep.subr.bf16.mxu0 0
  %283 = vmatpush1.bf16.xpose.msra.mxu0 0
  %284 = vmatprep.subr.bf16.mxu0 0
  %285 = vmatpush1.bf16.xpose.msra.mxu0 0
  %286 = vmatprep.subr.bf16.mxu0 0
  %287 = vmatpush1.bf16.xpose.msra.mxu0 0
  %288 = vmatprep.subr.bf16.mxu0 0
  %289 = vmatpush1.bf16.xpose.msra.mxu0 0
  %290 = vmatprep.subr.bf16.mxu0 0
  %291 = vmatpush1.bf16.xpose.msra.mxu0 0
  %292 = vmatprep.subr.bf16.mxu0 0
  %293 = vmatpush1.bf16.xpose.msra.mxu0 0
  %294 = vmatprep.subr.bf16.mxu0 0
  %295 = vmatpush1.bf16.xpose.msra.mxu0 0
  %296 = vmatprep.subr.bf16.mxu0 0
  %297 = vmatpush1.bf16.xpose.msra.mxu0 0
  %298 = vmatprep.subr.bf16.mxu0 0
  %299 = vmatpush1.bf16.xpose.msra.mxu0 0
  %300 = vmatprep.subr.bf16.mxu0 0
  %301 = vmatpush1.bf16.xpose.msra.mxu0 0
  %302 = vmatprep.mubr.bf16.mxu0 0
  %303 = vmatmul.mubr.bf16.gmra.mrb[0].mxu0 %v265
  %v304 = vpop.f32.mrb[0].mxu0
  %v305 = vadd.f32 %v137, %v304
  %v306 = vpop.f32.mrb[0].mxu0
  %v307 = vpop.f32.mrb[0].mxu0
  %v308 = vadd.f32 %v139, %v307
  %v309 = vpop.f32.mrb[0].mxu0
  %310 = vdwg.mxu0
  %v311 = vsel %vm142, %v305, -inf
  %312 = vmax.xlane.f32.xlu0 %v311
  %v313 = vpop.xlane.xlu0 %312
  %v314 = vsel %vm142, %v308, -inf
  %315 = vmax.xlane.f32.xlu0 %v314
  %v316 = vpop.xlane.xlu0 %315
  %v317 = vsub.f32 %v305, %v313
  %v318 = vsub.f32 %v308, %v316
  %v319 = vmul.f32 %v317, 1.442695
  %v320 = vpow.pop %v319
  %v321 = vmul.f32 %v318, 1.442695
  %v322 = vpow.pop %v321
  %v323 = vsel %vm142, %v320, 0.0
  %324 = vadd.xlane.f32.xlu0 %v323
  %v325 = vpop.xlane.xlu0 %324
  %v326 = vsel %vm142, %v322, 0.0
  %327 = vadd.xlane.f32.xlu0 %v326
  %v328 = vpop.xlane.xlu0 %327
  %v329 = vrcp.pop %v325
  %v330 = vrcp.pop %v328
  %v331 = vmul.f32 %v320, %v329
  %v332 = vmul.f32 %v322, %v330
  %v333 = vpack.c.bf16 %v332, %v331
  %334 = vrot.lane.b32.xlu0 %v127, 48
  %v335 = vpop.permute.xlu0 %334
  %v338 = vsel %vm142, %v333, 0
  %340 = vmatprep.subr.bf16.mxu0 0
  %341 = vmatpush1.bf16.msra.mxu0 %v335
  %342 = vmatprep.subr.bf16.mxu0 0
  %343 = vmatpush1.bf16.msra.mxu0 0
  %344 = vmatprep.subr.bf16.mxu0 0
  %345 = vmatpush1.bf16.msra.mxu0 0
  %346 = vmatprep.subr.bf16.mxu0 0
  %347 = vmatpush1.bf16.msra.mxu0 0
  %348 = vmatprep.subr.bf16.mxu0 0
  %349 = vmatpush1.bf16.msra.mxu0 0
  %350 = vmatprep.subr.bf16.mxu0 0
  %351 = vmatpush1.bf16.msra.mxu0 0
  %352 = vmatprep.subr.bf16.mxu0 0
  %353 = vmatpush1.bf16.msra.mxu0 0
  %354 = vmatprep.subr.bf16.mxu0 0
  %355 = vmatpush1.bf16.msra.mxu0 0
  %356 = vmatprep.subr.bf16.mxu0 0
  %357 = vmatpush1.bf16.msra.mxu0 0
  %358 = vmatprep.subr.bf16.mxu0 0
  %359 = vmatpush1.bf16.msra.mxu0 0
  %360 = vmatprep.subr.bf16.mxu0 0
  %361 = vmatpush1.bf16.msra.mxu0 0
  %362 = vmatprep.subr.bf16.mxu0 0
  %363 = vmatpush1.bf16.msra.mxu0 0
  %364 = vmatprep.subr.bf16.mxu0 0
  %365 = vmatpush1.bf16.msra.mxu0 0
  %366 = vmatprep.subr.bf16.mxu0 0
  %367 = vmatpush1.bf16.msra.mxu0 0
  %368 = vmatprep.subr.bf16.mxu0 0
  %369 = vmatpush1.bf16.msra.mxu0 0
  %370 = vmatprep.subr.bf16.mxu0 0
  %371 = vmatpush1.bf16.msra.mxu0 0
  %372 = vmatprep.mubr.bf16.mxu0 0
  %373 = vmatmul.mubr.bf16.gmra.mrb[0].mxu0 %v338
  %v374 = vpop.f32.mrb[0].mxu0
  %v375 = vadd.f32 0.0, %v374
  %v376 = vpop.f32.mrb[0].mxu0
  %v377 = vpop.f32.mrb[0].mxu0
  %v378 = vadd.f32 0.0, %v377
  %v379 = vpop.f32.mrb[0].mxu0
  %380 = vdwg.mxu0
  %383 = vrot.lane.b32.xlu0 %v375, 16
  %v384 = vpop.permute.xlu0 %383
  %385 = vrot.lane.b32.xlu0 %v378, 16
  %v386 = vpop.permute.xlu0 %385
  %v389 = vsel %vm142, %v254, %v384
  %v390 = vsel %vm142, %v257, %v386
  %v391 = vpack.c.bf16 %v390, %v389
  %v392 = vld [vmem:[%s1 + $0x10] sm:$0xf]
  %v393 = vld [vmem:[%s1 + $0x14] sm:$0xf]
  %v394 = vld [vmem:[%s1 + $0x18] sm:$0xf]
  %v395 = vld [vmem:[%s1 + $0x1c] sm:$0xf]
  %v400 = vunpack.c.l.b16 %v392
  %v401 = vunpack.c.l.b16 %v393
  %v402 = vunpack.c.l.b16 %v394
  %v403 = vunpack.c.l.b16 %v395
  %v404 = vpack.c.b16 %v401, %v400
  %v405 = vpack.c.b16 %v403, %v402
  %v409 = vsel %vm22, %v391, 0
  %411 = vmatprep.subr.bf16.mxu0 0
  %412 = vmatpush1.bf16.msra.mxu0 %v404
  %413 = vmatprep.subr.bf16.mxu0 0
  %414 = vmatpush1.bf16.msra.mxu0 %v405
  %415 = vmatprep.subr.bf16.mxu0 0
  %416 = vmatpush1.bf16.msra.mxu0 0
  %417 = vmatprep.subr.bf16.mxu0 0
  %418 = vmatpush1.bf16.msra.mxu0 0
  %419 = vmatprep.subr.bf16.mxu0 0
  %420 = vmatpush1.bf16.msra.mxu0 0
  %421 = vmatprep.subr.bf16.mxu0 0
  %422 = vmatpush1.bf16.msra.mxu0 0
  %423 = vmatprep.subr.bf16.mxu0 0
  %424 = vmatpush1.bf16.msra.mxu0 0
  %425 = vmatprep.subr.bf16.mxu0 0
  %426 = vmatpush1.bf16.msra.mxu0 0
  %427 = vmatprep.subr.bf16.mxu0 0
  %428 = vmatpush1.bf16.msra.mxu0 0
  %429 = vmatprep.subr.bf16.mxu0 0
  %430 = vmatpush1.bf16.msra.mxu0 0
  %431 = vmatprep.subr.bf16.mxu0 0
  %432 = vmatpush1.bf16.msra.mxu0 0
  %433 = vmatprep.subr.bf16.mxu0 0
  %434 = vmatpush1.bf16.msra.mxu0 0
  %435 = vmatprep.subr.bf16.mxu0 0
  %436 = vmatpush1.bf16.msra.mxu0 0
  %437 = vmatprep.subr.bf16.mxu0 0
  %438 = vmatpush1.bf16.msra.mxu0 0
  %439 = vmatprep.subr.bf16.mxu0 0
  %440 = vmatpush1.bf16.msra.mxu0 0
  %441 = vmatprep.subr.bf16.mxu0 0
  %442 = vmatpush1.bf16.msra.mxu0 0
  %443 = vmatprep.mubr.bf16.mxu0 0
  %444 = vmatmul.mubr.bf16.gmra.mrb[0].mxu0 %v409
  %v445 = vpop.f32.mrb[0].mxu0
  %v446 = vadd.f32 0.0, %v445
  %v447 = vpop.f32.mrb[0].mxu0
  %v448 = vpop.f32.mrb[0].mxu0
  %v449 = vadd.f32 0.0, %v448
  %v450 = vpop.f32.mrb[0].mxu0
  %451 = vdwg.mxu0
  %v452 = vadd.f32 %v15, %v446
  %v453 = vadd.f32 %v16, %v449
  %v454 = vlaneseq
  %v455 = vshrl.u32 %v454, 7
  %v456 = vsub.s32 3, %v455
  %v457 = vrot.slane %v17, %v456
  %v458 = vadd.f32 %v452, %v457
  %v459 = vadd.f32 %v453, %v457
  %v460 = vsel %vm22, %v458, 0.0
  %461 = vadd.xlane.f32.xlu0 %v460
  %v462 = vpop.xlane.xlu0 %461
  %v463 = vsel %vm22, %v459, 0.0
  %464 = vadd.xlane.f32.xlu0 %v463
  %v465 = vpop.xlane.xlu0 %464
  %v466 = vmul.f32 %v462, %v29
  %v467 = vmul.f32 %v465, %v29
  %v468 = vsub.f32 %v458, %v466
  %v469 = vsub.f32 %v459, %v467
  %v470 = vmul.f32 %v468, %v468
  %v471 = vmul.f32 %v469, %v469
  %v472 = vsel %vm22, %v470, 0.0
  %473 = vadd.xlane.f32.xlu0 %v472
  %v474 = vpop.xlane.xlu0 %473
  %v475 = vsel %vm22, %v471, 0.0
  %476 = vadd.xlane.f32.xlu0 %v475
  %v477 = vpop.xlane.xlu0 %476
  %v478 = vmul.f32 %v474, %v29
  %v479 = vmul.f32 %v477, %v29
  %v480 = vadd.f32 %v478, 1e-05
  %v481 = vadd.f32 %v479, 1e-05
  %v482 = vrsqrt.pop %v480
  %v483 = vrsqrt.pop %v481
  %v484 = vmul.f32 %v468, %v482
  %v485 = vmul.f32 %v469, %v483
  %v486 = vlaneseq
  %v487 = vshrl.u32 %v486, 7
  %v488 = vsub.s32 4, %v487
  %v489 = vrot.slane %v17, %v488
  %v490 = vmul.f32 %v484, %v489
  %v491 = vmul.f32 %v485, %v489
  %v492 = vlaneseq
  %v493 = vshrl.u32 %v492, 7
  %v494 = vsub.s32 5, %v493
  %v495 = vrot.slane %v17, %v494
  %v496 = vadd.f32 %v490, %v495
  %v497 = vadd.f32 %v491, %v495
  %v498 = vpack.c.bf16 %v497, %v496
  %v499 = vld [vmem:[%s1 + $0x20] sm:$0xf]
  %v500 = vld [vmem:[%s1 + $0x24] sm:$0xf]
  %v501 = vld [vmem:[%s1 + $0x28] sm:$0xf]
  %v502 = vld [vmem:[%s1 + $0x2c] sm:$0xf]
  %v503 = vlaneseq
  %v504 = vshrl.u32 %v503, 7
  %v505 = vsub.s32 6, %v504
  %v506 = vrot.slane %v17, %v505
  %v511 = vunpack.c.l.b16 %v499
  %v512 = vunpack.c.l.b16 %v500
  %v513 = vunpack.c.l.b16 %v501
  %v514 = vunpack.c.l.b16 %v502
  %v515 = vpack.c.b16 %v512, %v511
  %v516 = vpack.c.b16 %v514, %v513
  %v520 = vsel %vm22, %v498, 0
  %522 = vmatprep.subr.bf16.mxu0 0
  %523 = vmatpush1.bf16.msra.mxu0 %v515
  %524 = vmatprep.subr.bf16.mxu0 0
  %525 = vmatpush1.bf16.msra.mxu0 %v516
  %526 = vmatprep.subr.bf16.mxu0 0
  %527 = vmatpush1.bf16.msra.mxu0 0
  %528 = vmatprep.subr.bf16.mxu0 0
  %529 = vmatpush1.bf16.msra.mxu0 0
  %530 = vmatprep.subr.bf16.mxu0 0
  %531 = vmatpush1.bf16.msra.mxu0 0
  %532 = vmatprep.subr.bf16.mxu0 0
  %533 = vmatpush1.bf16.msra.mxu0 0
  %534 = vmatprep.subr.bf16.mxu0 0
  %535 = vmatpush1.bf16.msra.mxu0 0
  %536 = vmatprep.subr.bf16.mxu0 0
  %537 = vmatpush1.bf16.msra.mxu0 0
  %538 = vmatprep.subr.bf16.mxu0 0
  %539 = vmatpush1.bf16.msra.mxu0 0
  %540 = vmatprep.subr.bf16.mxu0 0
  %541 = vmatpush1.bf16.msra.mxu0 0
  %542 = vmatprep.subr.bf16.mxu0 0
  %543 = vmatpush1.bf16.msra.mxu0 0
  %544 = vmatprep.subr.bf16.mxu0 0
  %545 = vmatpush1.bf16.msra.mxu0 0
  %546 = vmatprep.subr.bf16.mxu0 0
  %547 = vmatpush1.bf16.msra.mxu0 0
  %548 = vmatprep.subr.bf16.mxu0 0
  %549 = vmatpush1.bf16.msra.mxu0 0
  %550 = vmatprep.subr.bf16.mxu0 0
  %551 = vmatpush1.bf16.msra.mxu0 0
  %552 = vmatprep.subr.bf16.mxu0 0
  %553 = vmatpush1.bf16.msra.mxu0 0
  %554 = vmatprep.mubr.bf16.mxu0 0
  %555 = vmatmul.mubr.bf16.gmra.mrb[0].mxu0 %v520
  %v556 = vpop.f32.mrb[0].mxu0
  %v557 = vadd.f32 %v506, %v556
  %v558 = vpop.f32.mrb[0].mxu0
  %v559 = vpop.f32.mrb[0].mxu0
  %v560 = vadd.f32 %v506, %v559
  %v561 = vpop.f32.mrb[0].mxu0
  %562 = vdwg.mxu0
  %v563 = vmul.f32 %v557, %v557
  %v564 = vmul.f32 %v560, %v560
  %v565 = vmul.f32 %v557, %v563
  %v566 = vmul.f32 %v560, %v564
  %v567 = vmul.f32 %v565, 0.044715
  %v568 = vmul.f32 %v566, 0.044715
  %v569 = vadd.f32 %v557, %v567
  %v570 = vadd.f32 %v560, %v568
  %v571 = vmul.f32 %v569, 0.7978846
  %v572 = vmul.f32 %v570, 0.7978846
  %v573 = vtanh.pop %v571
  %v574 = vtanh.pop %v572
  %v575 = vadd.f32 %v573, 1.0
  %v576 = vadd.f32 %v574, 1.0
  %v577 = vmul.f32 %v575, 0.5
  %v578 = vmul.f32 %v576, 0.5
  %v579 = vmul.f32 %v557, %v577
  %v580 = vmul.f32 %v560, %v578
  %v581 = vpack.c.bf16 %v580, %v579
  %v582 = vld [vmem:[%s1 + $0x30] sm:$0xf]
  %v583 = vld [vmem:[%s1 + $0x34] sm:$0xf]
  %v584 = vld [vmem:[%s1 + $0x38] sm:$0xf]
  %v585 = vld [vmem:[%s1 + $0x3c] sm:$0xf]
  %v586 = vld [vmem:[%s1 + $0x40] sm:$0xf]
  %v587 = vld [vmem:[%s1 + $0x44] sm:$0xf]
  %v588 = vld [vmem:[%s1 + $0x48] sm:$0xf]
  %v589 = vld [vmem:[%s1 + $0x4c] sm:$0xf]
  %v590 = vld [vmem:[%s1 + $0x50] sm:$0xf]
  %v591 = vld [vmem:[%s1 + $0x54] sm:$0xf]
  %v592 = vld [vmem:[%s1 + $0x58] sm:$0xf]
  %v593 = vld [vmem:[%s1 + $0x5c] sm:$0xf]
  %v594 = vld [vmem:[%s1 + $0x60] sm:$0xf]
  %v595 = vld [vmem:[%s1 + $0x64] sm:$0xf]
  %v596 = vld [vmem:[%s1 + $0x68] sm:$0xf]
  %v597 = vld [vmem:[%s1 + $0x6c] sm:$0xf]
  %v614 = vunpack.c.l.b16 %v582
  %v615 = vunpack.c.l.b16 %v583
  %v616 = vunpack.c.l.b16 %v584
  %v617 = vunpack.c.l.b16 %v585
  %v618 = vunpack.c.l.b16 %v586
  %v619 = vunpack.c.l.b16 %v587
  %v620 = vunpack.c.l.b16 %v588
  %v621 = vunpack.c.l.b16 %v589
  %v622 = vunpack.c.l.b16 %v590
  %v623 = vunpack.c.l.b16 %v591
  %v624 = vunpack.c.l.b16 %v592
  %v625 = vunpack.c.l.b16 %v593
  %v626 = vunpack.c.l.b16 %v594
  %v627 = vunpack.c.l.b16 %v595
  %v628 = vunpack.c.l.b16 %v596
  %v629 = vunpack.c.l.b16 %v597
  %v630 = vpack.c.b16 %v615, %v614
  %v631 = vpack.c.b16 %v617, %v616
  %v632 = vpack.c.b16 %v619, %v618
  %v633 = vpack.c.b16 %v621, %v620
  %v634 = vpack.c.b16 %v623, %v622
  %v635 = vpack.c.b16 %v625, %v624
  %v636 = vpack.c.b16 %v627, %v626
  %v637 = vpack.c.b16 %v629, %v628
  %646 = vmatprep.subr.bf16.mxu0 0
  %647 = vmatpush1.bf16.msra.mxu0 %v630
  %648 = vmatprep.subr.bf16.mxu0 0
  %649 = vmatpush1.bf16.msra.mxu0 %v631
  %650 = vmatprep.subr.bf16.mxu0 0
  %651 = vmatpush1.bf16.msra.mxu0 %v632
  %652 = vmatprep.subr.bf16.mxu0 0
  %653 = vmatpush1.bf16.msra.mxu0 %v633
  %654 = vmatprep.subr.bf16.mxu0 0
  %655 = vmatpush1.bf16.msra.mxu0 %v634
  %656 = vmatprep.subr.bf16.mxu0 0
  %657 = vmatpush1.bf16.msra.mxu0 %v635
  %658 = vmatprep.subr.bf16.mxu0 0
  %659 = vmatpush1.bf16.msra.mxu0 %v636
  %660 = vmatprep.subr.bf16.mxu0 0
  %661 = vmatpush1.bf16.msra.mxu0 %v637
  %662 = vmatprep.subr.bf16.mxu0 0
  %663 = vmatpush1.bf16.msra.mxu0 0
  %664 = vmatprep.subr.bf16.mxu0 0
  %665 = vmatpush1.bf16.msra.mxu0 0
  %666 = vmatprep.subr.bf16.mxu0 0
  %667 = vmatpush1.bf16.msra.mxu0 0
  %668 = vmatprep.subr.bf16.mxu0 0
  %669 = vmatpush1.bf16.msra.mxu0 0
  %670 = vmatprep.subr.bf16.mxu0 0
  %671 = vmatpush1.bf16.msra.mxu0 0
  %672 = vmatprep.subr.bf16.mxu0 0
  %673 = vmatpush1.bf16.msra.mxu0 0
  %674 = vmatprep.subr.bf16.mxu0 0
  %675 = vmatpush1.bf16.msra.mxu0 0
  %676 = vmatprep.subr.bf16.mxu0 0
  %677 = vmatpush1.bf16.msra.mxu0 0
  %678 = vmatprep.mubr.bf16.mxu0 0
  %679 = vmatmul.mubr.bf16.gmra.mrb[0].mxu0 %v581
  %v680 = vpop.f32.mrb[0].mxu0
  %v681 = vadd.f32 0.0, %v680
  %v682 = vpop.f32.mrb[0].mxu0
  %v683 = vpop.f32.mrb[0].mxu0
  %v684 = vadd.f32 0.0, %v683
  %v685 = vpop.f32.mrb[0].mxu0
  %686 = vdwg.mxu0
  %v687 = vadd.f32 %v458, %v681
  %v688 = vadd.f32 %v459, %v684
  %v689 = vlaneseq
  %v690 = vshrl.u32 %v689, 7
  %v691 = vsub.s32 7, %v690
  %v692 = vrot.slane %v17, %v691
  %v693 = vadd.f32 %v687, %v692
  %v694 = vadd.f32 %v688, %v692
  %v695 = vsel %vm22, %v693, 0.0
  %696 = vadd.xlane.f32.xlu0 %v695
  %v697 = vpop.xlane.xlu0 %696
  %v698 = vsel %vm22, %v694, 0.0
  %699 = vadd.xlane.f32.xlu0 %v698
  %v700 = vpop.xlane.xlu0 %699
  %v701 = vmul.f32 %v697, %v29
  %v702 = vmul.f32 %v700, %v29
  %v703 = vsub.f32 %v693, %v701
  %v704 = vsub.f32 %v694, %v702
  %v705 = vmul.f32 %v703, %v703
  %v706 = vmul.f32 %v704, %v704
  %v707 = vsel %vm22, %v705, 0.0
  %708 = vadd.xlane.f32.xlu0 %v707
  %v709 = vpop.xlane.xlu0 %708
  %v710 = vsel %vm22, %v706, 0.0
  %711 = vadd.xlane.f32.xlu0 %v710
  %v712 = vpop.xlane.xlu0 %711
  %v713 = vmul.f32 %v709, %v29
  %v714 = vmul.f32 %v712, %v29
  %v715 = vadd.f32 %v713, 1e-05
  %v716 = vadd.f32 %v714, 1e-05
  %v717 = vrsqrt.pop %v715
  %v718 = vrsqrt.pop %v716
  %v719 = vmul.f32 %v703, %v717
  %v720 = vmul.f32 %v704, %v718
  %v721 = vlaneseq
  %v722 = vshrl.u32 %v721, 7
  %v723 = vsub.s32 0, %v722
  %v724 = vrot.slane %v18, %v723
  %v725 = vmul.f32 %v719, %v724
  %v726 = vmul.f32 %v720, %v724
  %v727 = vlaneseq
  %v728 = vshrl.u32 %v727, 7
  %v729 = vsub.s32 1, %v728
  %v730 = vrot.slane %v18, %v729
  %v731 = vadd.f32 %v725, %v730
  %v732 = vadd.f32 %v726, %v730
  %v733 = vpack.c.bf16 %v732, %v731
  %v734 = vld [vmem:[%s1 + $0x70] sm:$0xf]
  %v735 = vld [vmem:[%s1 + $0x74] sm:$0xf]
  %v736 = vld [vmem:[%s1 + $0x78] sm:$0xf]
  %v737 = vld [vmem:[%s1 + $0x7c] sm:$0xf]
  %v738 = vlaneseq
  %v739 = vshrl.u32 %v738, 7
  %v740 = vsub.s32 2, %v739
  %v741 = vrot.slane %v18, %v740
  %v746 = vunpack.c.l.b16 %v734
  %v747 = vunpack.c.l.b16 %v735
  %v748 = vunpack.c.l.b16 %v736
  %v749 = vunpack.c.l.b16 %v737
  %v750 = vpack.c.b16 %v747, %v746
  %v751 = vpack.c.b16 %v749, %v748
  %v755 = vsel %vm22, %v733, 0
  %757 = vmatprep.subr.bf16.mxu0 0
  %758 = vmatpush1.bf16.msra.mxu0 %v750
  %759 = vmatprep.subr.bf16.mxu0 0
  %760 = vmatpush1.bf16.msra.mxu0 %v751
  %761 = vmatprep.subr.bf16.mxu0 0
  %762 = vmatpush1.bf16.msra.mxu0 0
  %763 = vmatprep.subr.bf16.mxu0 0
  %764 = vmatpush1.bf16.msra.mxu0 0
  %765 = vmatprep.subr.bf16.mxu0 0
  %766 = vmatpush1.bf16.msra.mxu0 0
  %767 = vmatprep.subr.bf16.mxu0 0
  %768 = vmatpush1.bf16.msra.mxu0 0
  %769 = vmatprep.subr.bf16.mxu0 0
  %770 = vmatpush1.bf16.msra.mxu0 0
  %771 = vmatprep.subr.bf16.mxu0 0
  %772 = vmatpush1.bf16.msra.mxu0 0
  %773 = vmatprep.subr.bf16.mxu0 0
  %774 = vmatpush1.bf16.msra.mxu0 0
  %775 = vmatprep.subr.bf16.mxu0 0
  %776 = vmatpush1.bf16.msra.mxu0 0
  %777 = vmatprep.subr.bf16.mxu0 0
  %778 = vmatpush1.bf16.msra.mxu0 0
  %779 = vmatprep.subr.bf16.mxu0 0
  %780 = vmatpush1.bf16.msra.mxu0 0
  %781 = vmatprep.subr.bf16.mxu0 0
  %782 = vmatpush1.bf16.msra.mxu0 0
  %783 = vmatprep.subr.bf16.mxu0 0
  %784 = vmatpush1.bf16.msra.mxu0 0
  %785 = vmatprep.subr.bf16.mxu0 0
  %786 = vmatpush1.bf16.msra.mxu0 0
  %787 = vmatprep.subr.bf16.mxu0 0
  %788 = vmatpush1.bf16.msra.mxu0 0
  %789 = vmatprep.mubr.bf16.mxu0 0
  %790 = vmatmul.mubr.bf16.gmra.mrb[0].mxu0 %v755
  %v791 = vpop.f32.mrb[0].mxu0
  %v792 = vadd.f32 %v741, %v791
  %v793 = vpop.f32.mrb[0].mxu0
  %v794 = vpop.f32.mrb[0].mxu0
  %v795 = vadd.f32 %v741, %v794
  %v796 = vpop.f32.mrb[0].mxu0
  %797 = vdwg.mxu0
  %v798 = vpack.c.bf16 %v795, %v792
  %800 = vrot.lane.b32.xlu0 %v798, 96
  %v801 = vpop.permute.xlu0 %800
  %v803 = vsel %vm142, %v798, 0
  %v806 = vsel %vm142, %v801, 0
  %808 = vmatprep.subr.bf16.mxu0 0
  %809 = vmatpush1.bf16.xpose.msra.mxu0 %v806
  %810 = vmatprep.subr.bf16.mxu0 0
  %811 = vmatpush1.bf16.xpose.msra.mxu0 0
  %812 = vmatprep.subr.bf16.mxu0 0
  %813 = vmatpush1.bf16.xpose.msra.mxu0 0
  %814 = vmatprep.subr.bf16.mxu0 0
  %815 = vmatpush1.bf16.xpose.msra.mxu0 0
  %816 = vmatprep.subr.bf16.mxu0 0
  %817 = vmatpush1.bf16.xpose.msra.mxu0 0
  %818 = vmatprep.subr.bf16.mxu0 0
  %819 = vmatpush1.bf16.xpose.msra.mxu0 0
  %820 = vmatprep.subr.bf16.mxu0 0
  %821 = vmatpush1.bf16.xpose.msra.mxu0 0
  %822 = vmatprep.subr.bf16.mxu0 0
  %823 = vmatpush1.bf16.xpose.msra.mxu0 0
  %824 = vmatprep.subr.bf16.mxu0 0
  %825 = vmatpush1.bf16.xpose.msra.mxu0 0
  %826 = vmatprep.subr.bf16.mxu0 0
  %827 = vmatpush1.bf16.xpose.msra.mxu0 0
  %828 = vmatprep.subr.bf16.mxu0 0
  %829 = vmatpush1.bf16.xpose.msra.mxu0 0
  %830 = vmatprep.subr.bf16.mxu0 0
  %831 = vmatpush1.bf16.xpose.msra.mxu0 0
  %832 = vmatprep.subr.bf16.mxu0 0
  %833 = vmatpush1.bf16.xpose.msra.mxu0 0
  %834 = vmatprep.subr.bf16.mxu0 0
  %835 = vmatpush1.bf16.xpose.msra.mxu0 0
  %836 = vmatprep.subr.bf16.mxu0 0
  %837 = vmatpush1.bf16.xpose.msra.mxu0 0
  %838 = vmatprep.subr.bf16.mxu0 0
  %839 = vmatpush1.bf16.xpose.msra.mxu0 0
  %840 = vmatprep.mubr.bf16.mxu0 0
  %841 = vmatmul.mubr.bf16.gmra.mrb[0].mxu0 %v803
  %v842 = vpop.f32.mrb[0].mxu0
  %v843 = vadd.f32 %v137, %v842
  %v844 = vpop.f32.mrb[0].mxu0
  %v845 = vpop.f32.mrb[0].mxu0
  %v846 = vadd.f32 %v139, %v845
  %v847 = vpop.f32.mrb[0].mxu0
  %848 = vdwg.mxu0
  %v849 = vsel %vm142, %v843, -inf
  %850 = vmax.xlane.f32.xlu0 %v849
  %v851 = vpop.xlane.xlu0 %850
  %v852 = vsel %vm142, %v846, -inf
  %853 = vmax.xlane.f32.xlu0 %v852
  %v854 = vpop.xlane.xlu0 %853
  %v855 = vsub.f32 %v843, %v851
  %v856 = vsub.f32 %v846, %v854
  %v857 = vmul.f32 %v855, 1.442695
  %v858 = vpow.pop %v857
  %v859 = vmul.f32 %v856, 1.442695
  %v860 = vpow.pop %v859
  %v861 = vsel %vm142, %v858, 0.0
  %862 = vadd.xlane.f32.xlu0 %v861
  %v863 = vpop.xlane.xlu0 %862
  %v864 = vsel %vm142, %v860, 0.0
  %865 = vadd.xlane.f32.xlu0 %v864
  %v866 = vpop.xlane.xlu0 %865
  %v867 = vrcp.pop %v863
  %v868 = vrcp.pop %v866
  %v869 = vmul.f32 %v858, %v867
  %v870 = vmul.f32 %v860, %v868
  %v871 = vpack.c.bf16 %v870, %v869
  %872 = vrot.lane.b32.xlu0 %v798, 64
  %v873 = vpop.permute.xlu0 %872
  %v876 = vsel %vm142, %v871, 0
  %878 = vmatprep.subr.bf16.mxu0 0
  %879 = vmatpush1.bf16.msra.mxu0 %v873
  %880 = vmatprep.subr.bf16.mxu0 0
  %881 = vmatpush1.bf16.msra.mxu0 0
  %882 = vmatprep.subr.bf16.mxu0 0
  %883 = vmatpush1.bf16.msra.mxu0 0
  %884 = vmatprep.subr.bf16.mxu0 0
  %885 = vmatpush1.bf16.msra.mxu0 0
  %886 = vmatprep.subr.bf16.mxu0 0
  %887 = vmatpush1.bf16.msra.mxu0 0
  %888 = vmatprep.subr.bf16.mxu0 0
  %889 = vmatpush1.bf16.msra.mxu0 0
  %890 = vmatprep.subr.bf16.mxu0 0
  %891 = vmatpush1.bf16.msra.mxu0 0
  %892 = vmatprep.subr.bf16.mxu0 0
  %893 = vmatpush1.bf16.msra.mxu0 0
  %894 = vmatprep.subr.bf16.mxu0 0
  %895 = vmatpush1.bf16.msra.mxu0 0
  %896 = vmatprep.subr.bf16.mxu0 0
  %897 = vmatpush1.bf16.msra.mxu0 0
  %898 = vmatprep.subr.bf16.mxu0 0
  %899 = vmatpush1.bf16.msra.mxu0 0
  %900 = vmatprep.subr.bf16.mxu0 0
  %901 = vmatpush1.bf16.msra.mxu0 0
  %902 = vmatprep.subr.bf16.mxu0 0
  %903 = vmatpush1.bf16.msra.mxu0 0
  %904 = vmatprep.subr.bf16.mxu0 0
  %905 = vmatpush1.bf16.msra.mxu0 0
  %906 = vmatprep.subr.bf16.mxu0 0
  %907 = vmatpush1.bf16.msra.mxu0 0
  %908 = vmatprep.subr.bf16.mxu0 0
  %909 = vmatpush1.bf16.msra.mxu0 0
  %910 = vmatprep.mubr.bf16.mxu0 0
  %911 = vmatmul.mubr.bf16.gmra.mrb[0].mxu0 %v876
  %v912 = vpop.f32.mrb[0].mxu0
  %v913 = vadd.f32 0.0, %v912
  %v914 = vpop.f32.mrb[0].mxu0
  %v915 = vpop.f32.mrb[0].mxu0
  %v916 = vadd.f32 0.0, %v915
  %v917 = vpop.f32.mrb[0].mxu0
  %918 = vdwg.mxu0
  %919 = vrot.lane.b32.xlu0 %v798, 112
  %v920 = vpop.permute.xlu0 %919
  %921 = vrot.lane.b32.xlu0 %v798, 80
  %v922 = vpop.permute.xlu0 %921
  %v924 = vsel %vm142, %v920, 0
  %v927 = vsel %vm142, %v922, 0
  %929 = vmatprep.subr.bf16.mxu0 0
  %930 = vmatpush1.bf16.xpose.msra.mxu0 %v927
  %931 = vmatprep.subr.bf16.mxu0 0
  %932 = vmatpush1.bf16.xpose.msra.mxu0 0
  %933 = vmatprep.subr.bf16.mxu0 0
  %934 = vmatpush1.bf16.xpose.msra.mxu0 0
  %935 = vmatprep.subr.bf16.mxu0 0
  %936 = vmatpush1.bf16.xpose.msra.mxu0 0
  %937 = vmatprep.subr.bf16.mxu0 0
  %938 = vmatpush1.bf16.xpose.msra.mxu0 0
  %939 = vmatprep.subr.bf16.mxu0 0
  %940 = vmatpush1.bf16.xpose.msra.mxu0 0
  %941 = vmatprep.subr.bf16.mxu0 0
  %942 = vmatpush1.bf16.xpose.msra.mxu0 0
  %943 = vmatprep.subr.bf16.mxu0 0
  %944 = vmatpush1.bf16.xpose.msra.mxu0 0
  %945 = vmatprep.subr.bf16.mxu0 0
  %946 = vmatpush1.bf16.xpose.msra.mxu0 0
  %947 = vmatprep.subr.bf16.mxu0 0
  %948 = vmatpush1.bf16.xpose.msra.mxu0 0
  %949 = vmatprep.subr.bf16.mxu0 0
  %950 = vmatpush1.bf16.xpose.msra.mxu0 0
  %951 = vmatprep.subr.bf16.mxu0 0
  %952 = vmatpush1.bf16.xpose.msra.mxu0 0
  %953 = vmatprep.subr.bf16.mxu0 0
  %954 = vmatpush1.bf16.xpose.msra.mxu0 0
  %955 = vmatprep.subr.bf16.mxu0 0
  %956 = vmatpush1.bf16.xpose.msra.mxu0 0
  %957 = vmatprep.subr.bf16.mxu0 0
  %958 = vmatpush1.bf16.xpose.msra.mxu0 0
  %959 = vmatprep.subr.bf16.mxu0 0
  %960 = vmatpush1.bf16.xpose.msra.mxu0 0
  %961 = vmatprep.mubr.bf16.mxu0 0
  %962 = vmatmul.mubr.bf16.gmra.mrb[0].mxu0 %v924
  %v963 = vpop.f32.mrb[0].mxu0
  %v964 = vadd.f32 %v137, %v963
  %v965 = vpop.f32.mrb[0].mxu0
  %v966 = vpop.f32.mrb[0].mxu0
  %v967 = vadd.f32 %v139, %v966
  %v968 = vpop.f32.mrb[0].mxu0
  %969 = vdwg.mxu0
  %v970 = vsel %vm142, %v964, -inf
  %971 = vmax.xlane.f32.xlu0 %v970
  %v972 = vpop.xlane.xlu0 %971
  %v973 = vsel %vm142, %v967, -inf
  %974 = vmax.xlane.f32.xlu0 %v973
  %v975 = vpop.xlane.xlu0 %974
  %v976 = vsub.f32 %v964, %v972
  %v977 = vsub.f32 %v967, %v975
  %v978 = vmul.f32 %v976, 1.442695
  %v979 = vpow.pop %v978
  %v980 = vmul.f32 %v977, 1.442695
  %v981 = vpow.pop %v980
  %v982 = vsel %vm142, %v979, 0.0
  %983 = vadd.xlane.f32.xlu0 %v982
  %v984 = vpop.xlane.xlu0 %983
  %v985 = vsel %vm142, %v981, 0.0
  %986 = vadd.xlane.f32.xlu0 %v985
  %v987 = vpop.xlane.xlu0 %986
  %v988 = vrcp.pop %v984
  %v989 = vrcp.pop %v987
  %v990 = vmul.f32 %v979, %v988
  %v991 = vmul.f32 %v981, %v989
  %v992 = vpack.c.bf16 %v991, %v990
  %993 = vrot.lane.b32.xlu0 %v798, 48
  %v994 = vpop.permute.xlu0 %993
  %v997 = vsel %vm142, %v992, 0
  %999 = vmatprep.subr.bf16.mxu0 0
  %1000 = vmatpush1.bf16.msra.mxu0 %v994
  %1001 = vmatprep.subr.bf16.mxu0 0
  %1002 = vmatpush1.bf16.msra.mxu0 0
  %1003 = vmatprep.subr.bf16.mxu0 0
  %1004 = vmatpush1.bf16.msra.mxu0 0
  %1005 = vmatprep.subr.bf16.mxu0 0
  %1006 = vmatpush1.bf16.msra.mxu0 0
  %1007 = vmatprep.subr.bf16.mxu0 0
  %1008 = vmatpush1.bf16.msra.mxu0 0
  %1009 = vmatprep.subr.bf16.mxu0 0
  %1010 = vmatpush1.bf16.msra.mxu0 0
  %1011 = vmatprep.subr.bf16.mxu0 0
  %1012 = vmatpush1.bf16.msra.mxu0 0
  %1013 = vmatprep.subr.bf16.mxu0 0
  %1014 = vmatpush1.bf16.msra.mxu0 0
  %1015 = vmatprep.subr.bf16.mxu0 0
  %1016 = vmatpush1.bf16.msra.mxu0 0
  %1017 = vmatprep.subr.bf16.mxu0 0
  %1018 = vmatpush1.bf16.msra.mxu0 0
  %1019 = vmatprep.subr.bf16.mxu0 0
  %1020 = vmatpush1.bf16.msra.mxu0 0
  %1021 = vmatprep.subr.bf16.mxu0 0
  %1022 = vmatpush1.bf16.msra.mxu0 0
  %1023 = vmatprep.subr.bf16.mxu0 0
  %1024 = vmatpush1.bf16.msra.mxu0 0
  %1025 = vmatprep.subr.bf16.mxu0 0
  %1026 = vmatpush1.bf16.msra.mxu0 0
  %1027 = vmatprep.subr.bf16.mxu0 0
  %1028 = vmatpush1.bf16.msra.mxu0 0
  %1029 = vmatprep.subr.bf16.mxu0 0
  %1030 = vmatpush1.bf16.msra.mxu0 0
  %1031 = vmatprep.mubr.bf16.mxu0 0
  %1032 = vmatmul.mubr.bf16.gmra.mrb[0].mxu0 %v997
  %v1033 = vpop.f32.mrb[0].mxu0
  %v1034 = vadd.f32 0.0, %v1033
  %v1035 = vpop.f32.mrb[0].mxu0
  %v1036 = vpop.f32.mrb[0].mxu0
  %v1037 = vadd.f32 0.0, %v1036
  %v1038 = vpop.f32.mrb[0].mxu0
  %1039 = vdwg.mxu0
  %1042 = vrot.lane.b32.xlu0 %v1034, 16
  %v1043 = vpop.permute.xlu0 %1042
  %1044 = vrot.lane.b32.xlu0 %v1037, 16
  %v1045 = vpop.permute.xlu0 %1044
  %v1048 = vsel %vm142, %v913, %v1043
  %v1049 = vsel %vm142, %v916, %v1045
  %v1050 = vpack.c.bf16 %v1049, %v1048
  %v1051 = vld [vmem:[%s1 + $0x80] sm:$0xf]
  %v1052 = vld [vmem:[%s1 + $0x84] sm:$0xf]
  %v1053 = vld [vmem:[%s1 + $0x88] sm:$0xf]
  %v1054 = vld [vmem:[%s1 + $0x8c] sm:$0xf]
  %v1059 = vunpack.c.l.b16 %v1051
  %v1060 = vunpack.c.l.b16 %v1052
  %v1061 = vunpack.c.l.b16 %v1053
  %v1062 = vunpack.c.l.b16 %v1054
  %v1063 = vpack.c.b16 %v1060, %v1059
  %v1064 = vpack.c.b16 %v1062, %v1061
  %v1068 = vsel %vm22, %v1050, 0
  %1070 = vmatprep.subr.bf16.mxu0 0
  %1071 = vmatpush1.bf16.msra.mxu0 %v1063
  %1072 = vmatprep.subr.bf16.mxu0 0
  %1073 = vmatpush1.bf16.msra.mxu0 %v1064
  %1074 = vmatprep.subr.bf16.mxu0 0
  %1075 = vmatpush1.bf16.msra.mxu0 0
  %1076 = vmatprep.subr.bf16.mxu0 0
  %1077 = vmatpush1.bf16.msra.mxu0 0
  %1078 = vmatprep.subr.bf16.mxu0 0
  %1079 = vmatpush1.bf16.msra.mxu0 0
  %1080 = vmatprep.subr.bf16.mxu0 0
  %1081 = vmatpush1.bf16.msra.mxu0 0
  %1082 = vmatprep.subr.bf16.mxu0 0
  %1083 = vmatpush1.bf16.msra.mxu0 0
  %1084 = vmatprep.subr.bf16.mxu0 0
  %1085 = vmatpush1.bf16.msra.mxu0 0
  %1086 = vmatprep.subr.bf16.mxu0 0
  %1087 = vmatpush1.bf16.msra.mxu0 0
  %1088 = vmatprep.subr.bf16.mxu0 0
  %1089 = vmatpush1.bf16.msra.mxu0 0
  %1090 = vmatprep.subr.bf16.mxu0 0
  %1091 = vmatpush1.bf16.msra.mxu0 0
  %1092 = vmatprep.subr.bf16.mxu0 0
  %1093 = vmatpush1.bf16.msra.mxu0 0
  %1094 = vmatprep.subr.bf16.mxu0 0
  %1095 = vmatpush1.bf16.msra.mxu0 0
  %1096 = vmatprep.subr.bf16.mxu0 0
  %1097 = vmatpush1.bf16.msra.mxu0 0
  %1098 = vmatprep.subr.bf16.mxu0 0
  %1099 = vmatpush1.bf16.msra.mxu0 0
  %1100 = vmatprep.subr.bf16.mxu0 0
  %1101 = vmatpush1.bf16.msra.mxu0 0
  %1102 = vmatprep.mubr.bf16.mxu0 0
  %1103 = vmatmul.mubr.bf16.gmra.mrb[0].mxu0 %v1068
  %v1104 = vpop.f32.mrb[0].mxu0
  %v1105 = vadd.f32 0.0, %v1104
  %v1106 = vpop.f32.mrb[0].mxu0
  %v1107 = vpop.f32.mrb[0].mxu0
  %v1108 = vadd.f32 0.0, %v1107
  %v1109 = vpop.f32.mrb[0].mxu0
  %1110 = vdwg.mxu0
  %v1111 = vadd.f32 %v693, %v1105
  %v1112 = vadd.f32 %v694, %v1108
  %v1113 = vlaneseq
  %v1114 = vshrl.u32 %v1113, 7
  %v1115 = vsub.s32 3, %v1114
  %v1116 = vrot.slane %v18, %v1115
  %v1117 = vadd.f32 %v1111, %v1116
  %v1118 = vadd.f32 %v1112, %v1116
  %v1119 = vsel %vm22, %v1117, 0.0
  %1120 = vadd.xlane.f32.xlu0 %v1119
  %v1121 = vpop.xlane.xlu0 %1120
  %v1122 = vsel %vm22, %v1118, 0.0
  %1123 = vadd.xlane.f32.xlu0 %v1122
  %v1124 = vpop.xlane.xlu0 %1123
  %v1125 = vmul.f32 %v1121, %v29
  %v1126 = vmul.f32 %v1124, %v29
  %v1127 = vsub.f32 %v1117, %v1125
  %v1128 = vsub.f32 %v1118, %v1126
  %v1129 = vmul.f32 %v1127, %v1127
  %v1130 = vmul.f32 %v1128, %v1128
  %v1131 = vsel %vm22, %v1129, 0.0
  %1132 = vadd.xlane.f32.xlu0 %v1131
  %v1133 = vpop.xlane.xlu0 %1132
  %v1134 = vsel %vm22, %v1130, 0.0
  %1135 = vadd.xlane.f32.xlu0 %v1134
  %v1136 = vpop.xlane.xlu0 %1135
  %v1137 = vmul.f32 %v1133, %v29
  %v1138 = vmul.f32 %v1136, %v29
  %v1139 = vadd.f32 %v1137, 1e-05
  %v1140 = vadd.f32 %v1138, 1e-05
  %v1141 = vrsqrt.pop %v1139
  %v1142 = vrsqrt.pop %v1140
  %v1143 = vmul.f32 %v1127, %v1141
  %v1144 = vmul.f32 %v1128, %v1142
  %v1145 = vlaneseq
  %v1146 = vshrl.u32 %v1145, 7
  %v1147 = vsub.s32 4, %v1146
  %v1148 = vrot.slane %v18, %v1147
  %v1149 = vmul.f32 %v1143, %v1148
  %v1150 = vmul.f32 %v1144, %v1148
  %v1151 = vlaneseq
  %v1152 = vshrl.u32 %v1151, 7
  %v1153 = vsub.s32 5, %v1152
  %v1154 = vrot.slane %v18, %v1153
  %v1155 = vadd.f32 %v1149, %v1154
  %v1156 = vadd.f32 %v1150, %v1154
  %v1157 = vpack.c.bf16 %v1156, %v1155
  %v1158 = vld [vmem:[%s1 + $0x90] sm:$0xf]
  %v1159 = vld [vmem:[%s1 + $0x94] sm:$0xf]
  %v1160 = vld [vmem:[%s1 + $0x98] sm:$0xf]
  %v1161 = vld [vmem:[%s1 + $0x9c] sm:$0xf]
  %v1162 = vlaneseq
  %v1163 = vshrl.u32 %v1162, 7
  %v1164 = vsub.s32 6, %v1163
  %v1165 = vrot.slane %v18, %v1164
  %v1170 = vunpack.c.l.b16 %v1158
  %v1171 = vunpack.c.l.b16 %v1159
  %v1172 = vunpack.c.l.b16 %v1160
  %v1173 = vunpack.c.l.b16 %v1161
  %v1174 = vpack.c.b16 %v1171, %v1170
  %v1175 = vpack.c.b16 %v1173, %v1172
  %v1179 = vsel %vm22, %v1157, 0
  %1181 = vmatprep.subr.bf16.mxu0 0
  %1182 = vmatpush1.bf16.msra.mxu0 %v1174
  %1183 = vmatprep.subr.bf16.mxu0 0
  %1184 = vmatpush1.bf16.msra.mxu0 %v1175
  %1185 = vmatprep.subr.bf16.mxu0 0
  %1186 = vmatpush1.bf16.msra.mxu0 0
  %1187 = vmatprep.subr.bf16.mxu0 0
  %1188 = vmatpush1.bf16.msra.mxu0 0
  %1189 = vmatprep.subr.bf16.mxu0 0
  %1190 = vmatpush1.bf16.msra.mxu0 0
  %1191 = vmatprep.subr.bf16.mxu0 0
  %1192 = vmatpush1.bf16.msra.mxu0 0
  %1193 = vmatprep.subr.bf16.mxu0 0
  %1194 = vmatpush1.bf16.msra.mxu0 0
  %1195 = vmatprep.subr.bf16.mxu0 0
  %1196 = vmatpush1.bf16.msra.mxu0 0
  %1197 = vmatprep.subr.bf16.mxu0 0
  %1198 = vmatpush1.bf16.msra.mxu0 0
  %1199 = vmatprep.subr.bf16.mxu0 0
  %1200 = vmatpush1.bf16.msra.mxu0 0
  %1201 = vmatprep.subr.bf16.mxu0 0
  %1202 = vmatpush1.bf16.msra.mxu0 0
  %1203 = vmatprep.subr.bf16.mxu0 0
  %1204 = vmatpush1.bf16.msra.mxu0 0
  %1205 = vmatprep.subr.bf16.mxu0 0
  %1206 = vmatpush1.bf16.msra.mxu0 0
  %1207 = vmatprep.subr.bf16.mxu0 0
  %1208 = vmatpush1.bf16.msra.mxu0 0
  %1209 = vmatprep.subr.bf16.mxu0 0
  %1210 = vmatpush1.bf16.msra.mxu0 0
  %1211 = vmatprep.subr.bf16.mxu0 0
  %1212 = vmatpush1.bf16.msra.mxu0 0
  %1213 = vmatprep.mubr.bf16.mxu0 0
  %1214 = vmatmul.mubr.bf16.gmra.mrb[0].mxu0 %v1179
  %v1215 = vpop.f32.mrb[0].mxu0
  %v1216 = vadd.f32 %v1165, %v1215
  %v1217 = vpop.f32.mrb[0].mxu0
  %v1218 = vpop.f32.mrb[0].mxu0
  %v1219 = vadd.f32 %v1165, %v1218
  %v1220 = vpop.f32.mrb[0].mxu0
  %1221 = vdwg.mxu0
  %v1222 = vmul.f32 %v1216, %v1216
  %v1223 = vmul.f32 %v1219, %v1219
  %v1224 = vmul.f32 %v1216, %v1222
  %v1225 = vmul.f32 %v1219, %v1223
  %v1226 = vmul.f32 %v1224, 0.044715
  %v1227 = vmul.f32 %v1225, 0.044715
  %v1228 = vadd.f32 %v1216, %v1226
  %v1229 = vadd.f32 %v1219, %v1227
  %v1230 = vmul.f32 %v1228, 0.7978846
  %v1231 = vmul.f32 %v1229, 0.7978846
  %v1232 = vtanh.pop %v1230
  %v1233 = vtanh.pop %v1231
  %v1234 = vadd.f32 %v1232, 1.0
  %v1235 = vadd.f32 %v1233, 1.0
  %v1236 = vmul.f32 %v1234, 0.5
  %v1237 = vmul.f32 %v1235, 0.5
  %v1238 = vmul.f32 %v1216, %v1236
  %v1239 = vmul.f32 %v1219, %v1237
  %v1240 = vpack.c.bf16 %v1239, %v1238
  %v1241 = vld [vmem:[%s1 + $0xa0] sm:$0xf]
  %v1242 = vld [vmem:[%s1 + $0xa4] sm:$0xf]
  %v1243 = vld [vmem:[%s1 + $0xa8] sm:$0xf]
  %v1244 = vld [vmem:[%s1 + $0xac] sm:$0xf]
  %v1245 = vld [vmem:[%s1 + $0xb0] sm:$0xf]
  %v1246 = vld [vmem:[%s1 + $0xb4] sm:$0xf]
  %v1247 = vld [vmem:[%s1 + $0xb8] sm:$0xf]
  %v1248 = vld [vmem:[%s1 + $0xbc] sm:$0xf]
  %v1249 = vld [vmem:[%s1 + $0xc0] sm:$0xf]
  %v1250 = vld [vmem:[%s1 + $0xc4] sm:$0xf]
  %v1251 = vld [vmem:[%s1 + $0xc8] sm:$0xf]
  %v1252 = vld [vmem:[%s1 + $0xcc] sm:$0xf]
  %v1253 = vld [vmem:[%s1 + $0xd0] sm:$0xf]
  %v1254 = vld [vmem:[%s1 + $0xd4] sm:$0xf]
  %v1255 = vld [vmem:[%s1 + $0xd8] sm:$0xf]
  %v1256 = vld [vmem:[%s1 + $0xdc] sm:$0xf]
  %v1273 = vunpack.c.l.b16 %v1241
  %v1274 = vunpack.c.l.b16 %v1242
  %v1275 = vunpack.c.l.b16 %v1243
  %v1276 = vunpack.c.l.b16 %v1244
  %v1277 = vunpack.c.l.b16 %v1245
  %v1278 = vunpack.c.l.b16 %v1246
  %v1279 = vunpack.c.l.b16 %v1247
  %v1280 = vunpack.c.l.b16 %v1248
  %v1281 = vunpack.c.l.b16 %v1249
  %v1282 = vunpack.c.l.b16 %v1250
  %v1283 = vunpack.c.l.b16 %v1251
  %v1284 = vunpack.c.l.b16 %v1252
  %v1285 = vunpack.c.l.b16 %v1253
  %v1286 = vunpack.c.l.b16 %v1254
  %v1287 = vunpack.c.l.b16 %v1255
  %v1288 = vunpack.c.l.b16 %v1256
  %v1289 = vpack.c.b16 %v1274, %v1273
  %v1290 = vpack.c.b16 %v1276, %v1275
  %v1291 = vpack.c.b16 %v1278, %v1277
  %v1292 = vpack.c.b16 %v1280, %v1279
  %v1293 = vpack.c.b16 %v1282, %v1281
  %v1294 = vpack.c.b16 %v1284, %v1283
  %v1295 = vpack.c.b16 %v1286, %v1285
  %v1296 = vpack.c.b16 %v1288, %v1287
  %1305 = vmatprep.subr.bf16.mxu0 0
  %1306 = vmatpush1.bf16.msra.mxu0 %v1289
  %1307 = vmatprep.subr.bf16.mxu0 0
  %1308 = vmatpush1.bf16.msra.mxu0 %v1290
  %1309 = vmatprep.subr.bf16.mxu0 0
  %1310 = vmatpush1.bf16.msra.mxu0 %v1291
  %1311 = vmatprep.subr.bf16.mxu0 0
  %1312 = vmatpush1.bf16.msra.mxu0 %v1292
  %1313 = vmatprep.subr.bf16.mxu0 0
  %1314 = vmatpush1.bf16.msra.mxu0 %v1293
  %1315 = vmatprep.subr.bf16.mxu0 0
  %1316 = vmatpush1.bf16.msra.mxu0 %v1294
  %1317 = vmatprep.subr.bf16.mxu0 0
  %1318 = vmatpush1.bf16.msra.mxu0 %v1295
  %1319 = vmatprep.subr.bf16.mxu0 0
  %1320 = vmatpush1.bf16.msra.mxu0 %v1296
  %1321 = vmatprep.subr.bf16.mxu0 0
  %1322 = vmatpush1.bf16.msra.mxu0 0
  %1323 = vmatprep.subr.bf16.mxu0 0
  %1324 = vmatpush1.bf16.msra.mxu0 0
  %1325 = vmatprep.subr.bf16.mxu0 0
  %1326 = vmatpush1.bf16.msra.mxu0 0
  %1327 = vmatprep.subr.bf16.mxu0 0
  %1328 = vmatpush1.bf16.msra.mxu0 0
  %1329 = vmatprep.subr.bf16.mxu0 0
  %1330 = vmatpush1.bf16.msra.mxu0 0
  %1331 = vmatprep.subr.bf16.mxu0 0
  %1332 = vmatpush1.bf16.msra.mxu0 0
  %1333 = vmatprep.subr.bf16.mxu0 0
  %1334 = vmatpush1.bf16.msra.mxu0 0
  %1335 = vmatprep.subr.bf16.mxu0 0
  %1336 = vmatpush1.bf16.msra.mxu0 0
  %1337 = vmatprep.mubr.bf16.mxu0 0
  %1338 = vmatmul.mubr.bf16.gmra.mrb[0].mxu0 %v1240
  %v1339 = vpop.f32.mrb[0].mxu0
  %v1340 = vadd.f32 0.0, %v1339
  %v1341 = vpop.f32.mrb[0].mxu0
  %v1342 = vpop.f32.mrb[0].mxu0
  %v1343 = vadd.f32 0.0, %v1342
  %v1344 = vpop.f32.mrb[0].mxu0
  %1345 = vdwg.mxu0
  %v1346 = vadd.f32 %v1117, %v1340
  %v1347 = vadd.f32 %v1118, %v1343
  %v1348 = vlaneseq
  %v1349 = vshrl.u32 %v1348, 7
  %v1350 = vsub.s32 7, %v1349
  %v1351 = vrot.slane %v18, %v1350
  %v1352 = vadd.f32 %v1346, %v1351
  %v1353 = vadd.f32 %v1347, %v1351
  %v1354 = vsel %vm22, %v1352, 0.0
  %1355 = vadd.xlane.f32.xlu0 %v1354
  %v1356 = vpop.xlane.xlu0 %1355
  %v1357 = vsel %vm22, %v1353, 0.0
  %1358 = vadd.xlane.f32.xlu0 %v1357
  %v1359 = vpop.xlane.xlu0 %1358
  %v1360 = vmul.f32 %v1356, %v29
  %v1361 = vmul.f32 %v1359, %v29
  %v1362 = vsub.f32 %v1352, %v1360
  %v1363 = vsub.f32 %v1353, %v1361
  %v1364 = vmul.f32 %v1362, %v1362
  %v1365 = vmul.f32 %v1363, %v1363
  %v1366 = vsel %vm22, %v1364, 0.0
  %1367 = vadd.xlane.f32.xlu0 %v1366
  %v1368 = vpop.xlane.xlu0 %1367
  %v1369 = vsel %vm22, %v1365, 0.0
  %1370 = vadd.xlane.f32.xlu0 %v1369
  %v1371 = vpop.xlane.xlu0 %1370
  %v1372 = vmul.f32 %v1368, %v29
  %v1373 = vmul.f32 %v1371, %v29
  %v1374 = vadd.f32 %v1372, 1e-05
  %v1375 = vadd.f32 %v1373, 1e-05
  %v1376 = vrsqrt.pop %v1374
  %v1377 = vrsqrt.pop %v1375
  %v1378 = vmul.f32 %v1362, %v1376
  %v1379 = vmul.f32 %v1363, %v1377
  %v1380 = vlaneseq
  %v1381 = vshrl.u32 %v1380, 7
  %v1382 = vsub.s32 0, %v1381
  %v1383 = vrot.slane %v19, %v1382
  %v1384 = vmul.f32 %v1378, %v1383
  %v1385 = vmul.f32 %v1379, %v1383
  %v1386 = vlaneseq
  %v1387 = vshrl.u32 %v1386, 7
  %v1388 = vsub.s32 1, %v1387
  %v1389 = vrot.slane %v19, %v1388
  %v1390 = vadd.f32 %v1384, %v1389
  %v1391 = vadd.f32 %v1385, %v1389
  %v1392 = vpack.c.bf16 %v1391, %v1390
  %v1393 = vld [vmem:[%s1 + $0xe0] sm:$0xf]
  %v1394 = vld [vmem:[%s1 + $0xe4] sm:$0xf]
  %v1395 = vld [vmem:[%s1 + $0xe8] sm:$0xf]
  %v1396 = vld [vmem:[%s1 + $0xec] sm:$0xf]
  %v1401 = vunpack.c.l.b16 %v1393
  %v1402 = vunpack.c.l.b16 %v1394
  %v1403 = vunpack.c.l.b16 %v1395
  %v1404 = vunpack.c.l.b16 %v1396
  %v1405 = vpack.c.b16 %v1402, %v1401
  %v1406 = vpack.c.b16 %v1404, %v1403
  %v1410 = vsel %vm22, %v1392, 0
  %1412 = vmatprep.subr.bf16.mxu0 0
  %1413 = vmatpush1.bf16.msra.mxu0 %v1405
  %1414 = vmatprep.subr.bf16.mxu0 0
  %1415 = vmatpush1.bf16.msra.mxu0 %v1406
  %1416 = vmatprep.subr.bf16.mxu0 0
  %1417 = vmatpush1.bf16.msra.mxu0 0
  %1418 = vmatprep.subr.bf16.mxu0 0
  %1419 = vmatpush1.bf16.msra.mxu0 0
  %1420 = vmatprep.subr.bf16.mxu0 0
  %1421 = vmatpush1.bf16.msra.mxu0 0
  %1422 = vmatprep.subr.bf16.mxu0 0
  %1423 = vmatpush1.bf16.msra.mxu0 0
  %1424 = vmatprep.subr.bf16.mxu0 0
  %1425 = vmatpush1.bf16.msra.mxu0 0
  %1426 = vmatprep.subr.bf16.mxu0 0
  %1427 = vmatpush1.bf16.msra.mxu0 0
  %1428 = vmatprep.subr.bf16.mxu0 0
  %1429 = vmatpush1.bf16.msra.mxu0 0
  %1430 = vmatprep.subr.bf16.mxu0 0
  %1431 = vmatpush1.bf16.msra.mxu0 0
  %1432 = vmatprep.subr.bf16.mxu0 0
  %1433 = vmatpush1.bf16.msra.mxu0 0
  %1434 = vmatprep.subr.bf16.mxu0 0
  %1435 = vmatpush1.bf16.msra.mxu0 0
  %1436 = vmatprep.subr.bf16.mxu0 0
  %1437 = vmatpush1.bf16.msra.mxu0 0
  %1438 = vmatprep.subr.bf16.mxu0 0
  %1439 = vmatpush1.bf16.msra.mxu0 0
  %1440 = vmatprep.subr.bf16.mxu0 0
  %1441 = vmatpush1.bf16.msra.mxu0 0
  %1442 = vmatprep.subr.bf16.mxu0 0
  %1443 = vmatpush1.bf16.msra.mxu0 0
  %1444 = vmatprep.mubr.bf16.mxu0 0
  %1445 = vmatmul.mubr.bf16.gmra.mrb[0].mxu0 %v1410
  %v1446 = vpop.f32.mrb[0].mxu0
  %v1447 = vadd.f32 0.0, %v1446
  %v1448 = vpop.f32.mrb[0].mxu0
  %v1449 = vpop.f32.mrb[0].mxu0
  %v1450 = vadd.f32 0.0, %v1449
  %v1451 = vpop.f32.mrb[0].mxu0
  %1452 = vdwg.mxu0
  %1453 = vst [vmem:[%s3] sm:$0xff] %v1447
  %1454 = vst [vmem:[%s3 + $0x8] sm:$0xff] %v1450
  // Predicated region
  $region14: #{transformer_forward.1} parent=0 // pred_check
    _
  $region15: #{transformer_forward.1} parent=0 // pred_check_branch
    %1456 = sbr.rel (0) target = $region17
  $region16: #{transformer_forward.1} parent=0 // pred_region
    _
  $region17: #{transformer_forward.1} parent=0 // pred_fallthru
    _
  // Predicated region
  $region18: #{transformer_forward.1} parent=0 // pred_check
    _
  $region19: #{transformer_forward.1} parent=0 // pred_check_branch
    %1458 = sbr.rel (0) target = $region21
  $region20: #{transformer_forward.1} parent=0 // pred_region
    _
  $region21: #{transformer_forward.1} parent=0 // pred_fallthru
    _

</llo_original>
